<compile_context>
chip_gen: v5e
topology: v5e:2x2
jax: 0.10.0
libtpu: 0.0.40
codegen_flags: <defaults>
</compile_context>

<pallas_src>
import jax
import jax.numpy as jnp
from jax.experimental import pallas as pl
from jax.experimental.pallas import tpu as pltpu

# ----------------------------- config ---------------------------------------
B = 2            # batch
S = 8            # sequence length
BS = B * S       # flattened rows
H = 32           # hidden size
NH = 2           # attention heads
HD = H // NH     # head dim
I = 64           # FFN intermediate size
L = 2            # number of transformer layers
VOCAB = 64       # vocab size
LN_EPS = 1e-12
WDT = jnp.bfloat16   # weight / MXU-operand dtype (f32 accumulation)


# --------------------------- kernel helpers ----------------------------------
def _layer_norm(v, g, b):
    mu = jnp.mean(v, axis=-1, keepdims=True)
    var = jnp.mean(jnp.square(v - mu), axis=-1, keepdims=True)
    return (v - mu) * jax.lax.rsqrt(var + LN_EPS) * g + b


def _dot(a, w_lo):
    """2D MXU matmul: cast activation to bf16, accumulate in f32."""
    return jnp.dot(a.astype(WDT), w_lo, preferred_element_type=jnp.float32)


# ------------------------------ fused kernel ---------------------------------
def bert_fused_kernel(ids_ref, word_ref, pos_type_ref, gE_ref, bE_ref, bias_ref,
                      wqkv_ref, bqkv_ref, wo_ref, bo_ref, g1_ref, be1_ref,
                      w1_ref, b1_ref, w2_ref, b2_ref, g2_ref, be2_ref,
                      cls_ref, x_scr):
    l = pl.program_id(0)

    # ---- embeddings + LN at the first grid step; x stays resident in VMEM ---
    @pl.when(l == 0)
    def _():
        ids = ids_ref[...]                                        # (BS, 1) i32
        iota_v = jax.lax.broadcasted_iota(jnp.int32, (BS, VOCAB), 1)
        onehot = (iota_v == ids).astype(WDT)                      # (BS, VOCAB)
        emb = jnp.dot(onehot, word_ref[...],
                      preferred_element_type=jnp.float32)         # (BS, H)
        emb = emb + pos_type_ref[...]                             # + pos + type
        x_scr[...] = _layer_norm(emb, gE_ref[...], bE_ref[...])

    # ------------------------------ one encoder layer ------------------------
    x = x_scr[...]                                                # (BS, H) f32

    # Fused QKV projection: one (BS,H)@(H,3H) MXU call.
    qkv = _dot(x, wqkv_ref[...]) + bqkv_ref[...]                  # (BS, 3H) f32
    scale = 1.0 / jnp.sqrt(jnp.float32(HD))
    q3 = (qkv[:, 0:H] * scale).reshape(B, S, H).astype(WDT)       # pre-scaled
    k3 = qkv[:, H:2 * H].reshape(B, S, H).astype(WDT)
    v3 = qkv[:, 2 * H:3 * H].reshape(B, S, H).astype(WDT)

    bias3 = bias_ref[...][:, None, :]                             # (B,1,S) hoisted
    wo = wo_ref[...]                                              # (H, H) bf16

    attn = jnp.zeros((BS, H), jnp.float32)
    # Per-head attention (static loop, NH small); each head's context is folded
    # through its slice of the output projection (no in-kernel concat).
    for h in range(NH):
        sl = slice(h * HD, (h + 1) * HD)
        s = jnp.einsum('bqd,bkd->bqk', q3[..., sl], k3[..., sl],
                       preferred_element_type=jnp.float32) + bias3
        s = s - jnp.max(s, axis=-1, keepdims=True)
        p = jnp.exp(s)
        p = p * pl.reciprocal(jnp.sum(p, axis=-1, keepdims=True), approx=True)
        ctx = jnp.einsum('bqk,bkd->bqd', p.astype(WDT), v3[..., sl],
                         preferred_element_type=jnp.float32)      # (B,S,HD)
        attn = attn + _dot(ctx.reshape(BS, HD), wo[sl, :])
    attn = attn + bo_ref[...]

    y = _layer_norm(x + attn, g1_ref[...], be1_ref[...])          # (BS, H)

    hmid = _dot(y, w1_ref[...]) + b1_ref[...]                     # (BS, I)
    # TODO(synk): HuggingFace BERT uses exact erf GELU; tanh approximation here.
    hmid = jax.nn.gelu(hmid, approximate=True)
    ffn = _dot(hmid, w2_ref[...]) + b2_ref[...]                   # (BS, H)

    x_new = _layer_norm(y + ffn, g2_ref[...], be2_ref[...])
    x_scr[...] = x_new

    # ---- emit only the CLS rows after the last layer ------------------------
    @pl.when(l == L - 1)
    def _():
        cls_ref[...] = x_new.reshape(B, S, H)[:, 0, :]            # (B, H)


# ----------------------------- wrapper ----------------------------------------
def _spec_full(shape):
    """Non-stacked input: whole array, resident across the layer grid axis."""
    nd = len(shape)
    return pl.BlockSpec(tuple(shape), lambda l, nd=nd: (0,) * nd)


def _spec_stacked(per_layer_shape):
    """Stacked (L, ...) weight: block = one layer's slab, pipelined over l."""
    nd = len(per_layer_shape)
    return pl.BlockSpec((None,) + tuple(per_layer_shape),
                        lambda l, nd=nd: (l,) + (0,) * nd)


def bioclinicalbert_ft_forward(params, input_ids, attention_mask):
    """Mirrors BioClinicalBERT_FT.forward: run BERT, return CLS embedding."""
    ids2d = input_ids.reshape(BS, 1).astype(jnp.int32)
    # HuggingFace-style extended attention mask: (1 - mask) * -1e9 added to logits.
    bias = (1.0 - attention_mask.astype(jnp.float32)) * -1e9       # (B, S)
    # position + token-type embeddings precombined (token_type_ids == 0).
    pos_type = jnp.tile(params['pos_emb'] + params['type_emb'][0:1], (B, 1))  # (BS,H)

    args = (ids2d, params['word_emb'], pos_type,
            params['emb_ln_g'], params['emb_ln_b'], bias,
            params['wqkv'], params['bqkv'], params['wo'], params['bo'],
            params['ln1_g'], params['ln1_b'], params['w1'], params['b1'],
            params['w2'], params['b2'], params['ln2_g'], params['ln2_b'])

    in_specs = [
        _spec_full((BS, 1)),            # ids
        _spec_full((VOCAB, H)),         # word embedding table
        _spec_full((BS, H)),            # pos + type embeddings
        _spec_full((1, H)),             # emb LN gamma
        _spec_full((1, H)),             # emb LN beta
        _spec_full((B, S)),             # attention mask bias
        _spec_stacked((H, 3 * H)),      # fused Wqkv
        _spec_stacked((1, 3 * H)),      # fused bqkv
        _spec_stacked((H, H)),          # Wo
        _spec_stacked((1, H)),          # bo
        _spec_stacked((1, H)),          # LN1 gamma
        _spec_stacked((1, H)),          # LN1 beta
        _spec_stacked((H, I)),          # W1
        _spec_stacked((1, I)),          # b1
        _spec_stacked((I, H)),          # W2
        _spec_stacked((1, H)),          # b2
        _spec_stacked((1, H)),          # LN2 gamma
        _spec_stacked((1, H)),          # LN2 beta
    ]

    return pl.pallas_call(
        bert_fused_kernel,
        out_shape=jax.ShapeDtypeStruct((B, H), jnp.float32),
        grid_spec=pltpu.PrefetchScalarGridSpec(
            num_scalar_prefetch=0,
            grid=(L,),
            in_specs=in_specs,
            out_specs=pl.BlockSpec((B, H), lambda l: (0, 0)),
            scratch_shapes=[pltpu.VMEM((BS, H), jnp.float32)],   # activation carry
        ),
        compiler_params=pltpu.CompilerParams(
            dimension_semantics=("arbitrary",)),   # layer axis is sequential
    )(*args)


# --------------------------- deterministic init -------------------------------
def init_params(key):
    scale = 0.02
    ks = iter(jax.random.split(key, 8))

    def w(shape, dtype=WDT):
        return (scale * jax.random.normal(next(ks), shape, jnp.float32)).astype(dtype)

    return {
        # embedding tables
        'word_emb': w((VOCAB, H)),                              # bf16
        'pos_emb': w((S, H), jnp.float32),
        'type_emb': w((2, H), jnp.float32),
        'emb_ln_g': jnp.ones((1, H), jnp.float32),
        'emb_ln_b': jnp.zeros((1, H), jnp.float32),
        # stacked per-layer weights (leading axis = layer)
        'wqkv': w((L, H, 3 * H)),                               # bf16
        'bqkv': jnp.zeros((L, 1, 3 * H), jnp.float32),
        'wo':   w((L, H, H)),                                   # bf16
        'bo':   jnp.zeros((L, 1, H), jnp.float32),
        'ln1_g': jnp.ones((L, 1, H), jnp.float32),
        'ln1_b': jnp.zeros((L, 1, H), jnp.float32),
        'w1':   w((L, H, I)),                                   # bf16
        'b1':   jnp.zeros((L, 1, I), jnp.float32),
        'w2':   w((L, I, H)),                                   # bf16
        'b2':   jnp.zeros((L, 1, H), jnp.float32),
        'ln2_g': jnp.ones((L, 1, H), jnp.float32),
        'ln2_b': jnp.zeros((L, 1, H), jnp.float32),
    }


# ------------------------------- main -----------------------------------------
if __name__ == "__main__":
    root = jax.random.PRNGKey(0)
    k_param, k_ids = jax.random.split(root)

    params = init_params(k_param)
    input_ids = jax.random.randint(k_ids, (B, S), 0, VOCAB, dtype=jnp.int32)
    attention_mask = jnp.ones((B, S), jnp.int32).at[1, S - 2:].set(0)  # pad tail of row 1

    cls = jax.jit(bioclinicalbert_ft_forward)(params, input_ids, attention_mask)
    cls = jax.block_until_ready(cls)

    assert cls.shape == (B, H), cls.shape
    assert bool(jnp.all(jnp.isfinite(cls)))
    print("KERNEL_OK")
</pallas_src>

<mosaic_0001>
module attributes {stable_mosaic.version = 11 : i64} {
  func.func @bert_fused_kernel(%arg0: i32, %arg1: memref<16x1xi32, #tpu.memory_space<vmem>>, %arg2: memref<64x32xbf16, #tpu.memory_space<vmem>>, %arg3: memref<16x32xf32, #tpu.memory_space<vmem>>, %arg4: memref<1x32xf32, #tpu.memory_space<vmem>>, %arg5: memref<1x32xf32, #tpu.memory_space<vmem>>, %arg6: memref<2x8xf32, #tpu.memory_space<vmem>>, %arg7: memref<1x32x96xbf16, #tpu.memory_space<vmem>>, %arg8: memref<1x1x96xf32, #tpu.memory_space<vmem>>, %arg9: memref<1x32x32xbf16, #tpu.memory_space<vmem>>, %arg10: memref<1x1x32xf32, #tpu.memory_space<vmem>>, %arg11: memref<1x1x32xf32, #tpu.memory_space<vmem>>, %arg12: memref<1x1x32xf32, #tpu.memory_space<vmem>>, %arg13: memref<1x32x64xbf16, #tpu.memory_space<vmem>>, %arg14: memref<1x1x64xf32, #tpu.memory_space<vmem>>, %arg15: memref<1x64x32xbf16, #tpu.memory_space<vmem>>, %arg16: memref<1x1x32xf32, #tpu.memory_space<vmem>>, %arg17: memref<1x1x32xf32, #tpu.memory_space<vmem>>, %arg18: memref<1x1x32xf32, #tpu.memory_space<vmem>>, %arg19: memref<2x32xf32, #tpu.memory_space<vmem>>, %arg20: memref<16x32xf32, #tpu.memory_space<vmem>>) attributes {dimension_semantics = [#tpu.dimension_semantics<arbitrary>], iteration_bounds = array<i64: 2>, scalar_prefetch = 0 : i64, scratch_operands = 1 : i64, tpu.core_type = #tpu.core_type<tc>, window_params = [{pipeline_mode = #tpu.pipeline_mode<synchronous>, transform_indices = @transform_0, window_bounds = array<i64: 16, 1>}, {pipeline_mode = #tpu.pipeline_mode<synchronous>, transform_indices = @transform_1, window_bounds = array<i64: 64, 32>}, {pipeline_mode = #tpu.pipeline_mode<synchronous>, transform_indices = @transform_2, window_bounds = array<i64: 16, 32>}, {pipeline_mode = #tpu.pipeline_mode<synchronous>, transform_indices = @transform_3, window_bounds = array<i64: 1, 32>}, {pipeline_mode = #tpu.pipeline_mode<synchronous>, transform_indices = @transform_4, window_bounds = array<i64: 1, 32>}, {pipeline_mode = #tpu.pipeline_mode<synchronous>, transform_indices = @transform_5, window_bounds = array<i64: 2, 8>}, {transform_indices = @transform_6, window_bounds = array<i64: 1, 32, 96>}, {transform_indices = @transform_7, window_bounds = array<i64: 1, 1, 96>}, {transform_indices = @transform_8, window_bounds = array<i64: 1, 32, 32>}, {transform_indices = @transform_9, window_bounds = array<i64: 1, 1, 32>}, {transform_indices = @transform_10, window_bounds = array<i64: 1, 1, 32>}, {transform_indices = @transform_11, window_bounds = array<i64: 1, 1, 32>}, {transform_indices = @transform_12, window_bounds = array<i64: 1, 32, 64>}, {transform_indices = @transform_13, window_bounds = array<i64: 1, 1, 64>}, {transform_indices = @transform_14, window_bounds = array<i64: 1, 64, 32>}, {transform_indices = @transform_15, window_bounds = array<i64: 1, 1, 32>}, {transform_indices = @transform_16, window_bounds = array<i64: 1, 1, 32>}, {transform_indices = @transform_17, window_bounds = array<i64: 1, 1, 32>}, {pipeline_mode = #tpu.pipeline_mode<synchronous>, transform_indices = @transform_18, window_bounds = array<i64: 2, 32>}]} {
    %c0_i32 = arith.constant 0 : i32
    %0 = arith.cmpi eq, %arg0, %c0_i32 : i32
    %1 = arith.extui %0 : i1 to i32
    %c0_i32_0 = arith.constant 0 : i32
    %2 = arith.cmpi ne, %1, %c0_i32_0 : i32
    scf.if %2 {
      %c0_72 = arith.constant 0 : index
      %c0_73 = arith.constant 0 : index
      %167 = vector.load %arg1[%c0_72, %c0_73] : memref<16x1xi32, #tpu.memory_space<vmem>>, vector<16x1xi32>
      %168 = tpu.iota {dimensions = array<i32: 1>} : vector<16x64xi32>
      %169 = vector.broadcast %167 : vector<16x1xi32> to vector<16x64xi32>
      %170 = arith.cmpi eq, %168, %169 : vector<16x64xi32>
      %171 = arith.extui %170 : vector<16x64xi1> to vector<16x64xi32>
      %172 = arith.sitofp %171 : vector<16x64xi32> to vector<16x64xf32>
      %173 = arith.truncf %172 : vector<16x64xf32> to vector<16x64xbf16>
      %c0_74 = arith.constant 0 : index
      %c0_75 = arith.constant 0 : index
      %174 = vector.load %arg2[%c0_74, %c0_75] : memref<64x32xbf16, #tpu.memory_space<vmem>>, vector<64x32xbf16>
      %cst_76 = arith.constant dense<0.000000e+00> : vector<16x32xf32>
      %175 = tpu.matmul %173, %174, %cst_76 {dimension_numbers = #tpu.dot_dimension_numbers<[1], [0], [0], [1], [0, 0, 1, 1], [], []>} : vector<16x64xbf16>, vector<64x32xbf16>, vector<16x32xf32> -> vector<16x32xf32>
      %c0_77 = arith.constant 0 : index
      %c0_78 = arith.constant 0 : index
      %176 = vector.load %arg3[%c0_77, %c0_78] : memref<16x32xf32, #tpu.memory_space<vmem>>, vector<16x32xf32>
      %177 = arith.addf %175, %176 : vector<16x32xf32>
      %c0_79 = arith.constant 0 : index
      %c0_80 = arith.constant 0 : index
      %178 = vector.load %arg4[%c0_79, %c0_80] : memref<1x32xf32, #tpu.memory_space<vmem>>, vector<1x32xf32>
      %c0_81 = arith.constant 0 : index
      %c0_82 = arith.constant 0 : index
      %179 = vector.load %arg5[%c0_81, %c0_82] : memref<1x32xf32, #tpu.memory_space<vmem>>, vector<1x32xf32>
      %cst_83 = arith.constant dense<0.000000e+00> : vector<16xf32>
      %180 = vector.multi_reduction <add>, %177, %cst_83 [1] : vector<16x32xf32> to vector<16xf32>
      %181 = vector.shape_cast %180 : vector<16xf32> to vector<16x1xf32>
      %cst_84 = arith.constant 3.200000e+01 : f32
      %182 = vector.broadcast %cst_84 : f32 to vector<16x1xf32>
      %183 = arith.divf %181, %182 : vector<16x1xf32>
      %184 = vector.broadcast %183 : vector<16x1xf32> to vector<16x32xf32>
      %185 = arith.subf %177, %184 : vector<16x32xf32>
      %186 = arith.mulf %185, %185 : vector<16x32xf32>
      %cst_85 = arith.constant dense<0.000000e+00> : vector<16xf32>
      %187 = vector.multi_reduction <add>, %186, %cst_85 [1] : vector<16x32xf32> to vector<16xf32>
      %188 = vector.shape_cast %187 : vector<16xf32> to vector<16x1xf32>
      %cst_86 = arith.constant 3.200000e+01 : f32
      %189 = vector.broadcast %cst_86 : f32 to vector<16x1xf32>
      %190 = arith.divf %188, %189 : vector<16x1xf32>
      %191 = vector.broadcast %183 : vector<16x1xf32> to vector<16x32xf32>
      %192 = arith.subf %177, %191 : vector<16x32xf32>
      %cst_87 = arith.constant 9.99999996E-13 : f32
      %193 = vector.broadcast %cst_87 : f32 to vector<16x1xf32>
      %194 = arith.addf %190, %193 : vector<16x1xf32>
      %195 = math.rsqrt %194 : vector<16x1xf32>
      %196 = vector.broadcast %195 : vector<16x1xf32> to vector<16x32xf32>
      %197 = arith.mulf %192, %196 : vector<16x32xf32>
      %198 = vector.broadcast %178 : vector<1x32xf32> to vector<16x32xf32>
      %199 = arith.mulf %197, %198 : vector<16x32xf32>
      %200 = vector.broadcast %179 : vector<1x32xf32> to vector<16x32xf32>
      %201 = arith.addf %199, %200 : vector<16x32xf32>
      %c0_88 = arith.constant 0 : index
      %c0_89 = arith.constant 0 : index
      %202 = vector.load %arg20[%c0_88, %c0_89] : memref<16x32xf32, #tpu.memory_space<vmem>>, vector<16x32xf32>
      tpu.vector_store %arg20[%c0_88, %c0_89], %201 {strides = array<i32>} : memref<16x32xf32, #tpu.memory_space<vmem>>, vector<16x32xf32>,
    } else {
    }
    %c0 = arith.constant 0 : index
    %c0_1 = arith.constant 0 : index
    %3 = vector.load %arg20[%c0, %c0_1] : memref<16x32xf32, #tpu.memory_space<vmem>>, vector<16x32xf32>
    %c0_2 = arith.constant 0 : index
    %c0_3 = arith.constant 0 : index
    %c0_4 = arith.constant 0 : index
    %4 = vector.load %arg7[%c0_2, %c0_3, %c0_4] : memref<1x32x96xbf16, #tpu.memory_space<vmem>>, vector<1x32x96xbf16>
    %5 = vector.shape_cast %4 : vector<1x32x96xbf16> to vector<32x96xbf16>
    %6 = arith.truncf %3 : vector<16x32xf32> to vector<16x32xbf16>
    %cst = arith.constant dense<0.000000e+00> : vector<16x96xf32>
    %7 = tpu.matmul %6, %5, %cst {dimension_numbers = #tpu.dot_dimension_numbers<[1], [0], [0], [1], [0, 0, 1, 1], [], []>} : vector<16x32xbf16>, vector<32x96xbf16>, vector<16x96xf32> -> vector<16x96xf32>
    %c0_5 = arith.constant 0 : index
    %c0_6 = arith.constant 0 : index
    %c0_7 = arith.constant 0 : index
    %8 = vector.load %arg8[%c0_5, %c0_6, %c0_7] : memref<1x1x96xf32, #tpu.memory_space<vmem>>, vector<1x1x96xf32>
    %9 = vector.shape_cast %8 : vector<1x1x96xf32> to vector<1x96xf32>
    %10 = vector.broadcast %9 : vector<1x96xf32> to vector<16x96xf32>
    %11 = arith.addf %7, %10 : vector<16x96xf32>
    %cst_8 = arith.constant 1.600000e+01 : f32
    %12 = math.sqrt %cst_8 : f32
    %cst_9 = arith.constant 1.000000e+00 : f32
    %13 = arith.divf %cst_9, %12 : f32
    %14 = vector.extract_strided_slice %11 {offsets = [0, 0], sizes = [16, 32], strides = [1, 1]} : vector<16x96xf32> to vector<16x32xf32>
    %15 = vector.broadcast %13 : f32 to vector<16x32xf32>
    %16 = arith.mulf %14, %15 : vector<16x32xf32>
    %17 = vector.shape_cast %16 : vector<16x32xf32> to vector<2x8x32xf32>
    %18 = arith.truncf %17 : vector<2x8x32xf32> to vector<2x8x32xbf16>
    %19 = vector.extract_strided_slice %11 {offsets = [0, 32], sizes = [16, 32], strides = [1, 1]} : vector<16x96xf32> to vector<16x32xf32>
    %20 = vector.shape_cast %19 : vector<16x32xf32> to vector<2x8x32xf32>
    %21 = arith.truncf %20 : vector<2x8x32xf32> to vector<2x8x32xbf16>
    %22 = vector.extract_strided_slice %11 {offsets = [0, 64], sizes = [16, 32], strides = [1, 1]} : vector<16x96xf32> to vector<16x32xf32>
    %23 = vector.shape_cast %22 : vector<16x32xf32> to vector<2x8x32xf32>
    %24 = arith.truncf %23 : vector<2x8x32xf32> to vector<2x8x32xbf16>
    %c0_10 = arith.constant 0 : index
    %c0_11 = arith.constant 0 : index
    %25 = vector.load %arg6[%c0_10, %c0_11] : memref<2x8xf32, #tpu.memory_space<vmem>>, vector<2x8xf32>
    %26 = vector.shape_cast %25 : vector<2x8xf32> to vector<2x1x8xf32>
    %c0_12 = arith.constant 0 : index
    %c0_13 = arith.constant 0 : index
    %c0_14 = arith.constant 0 : index
    %27 = vector.load %arg9[%c0_12, %c0_13, %c0_14] : memref<1x32x32xbf16, #tpu.memory_space<vmem>>, vector<1x32x32xbf16>
    %28 = vector.shape_cast %27 : vector<1x32x32xbf16> to vector<32x32xbf16>
    %cst_15 = arith.constant 0.000000e+00 : f32
    %29 = vector.broadcast %cst_15 : f32 to vector<16x32xf32>
    %30 = vector.extract_strided_slice %18 {offsets = [0, 0, 0], sizes = [2, 8, 16], strides = [1, 1, 1]} : vector<2x8x32xbf16> to vector<2x8x16xbf16>
    %31 = vector.extract_strided_slice %21 {offsets = [0, 0, 0], sizes = [2, 8, 16], strides = [1, 1, 1]} : vector<2x8x32xbf16> to vector<2x8x16xbf16>
    "tpu.trace_start"() <{level = 10 : i32, message = "bqd,bkd->bqk"}> : () -> ()
    %cst_16 = arith.constant dense<0.000000e+00> : vector<2x8x8xf32>
    %32 = tpu.matmul %30, %31, %cst_16 {dimension_numbers = #tpu.dot_dimension_numbers<[2], [2], [1], [1], [0, 0, 0, 1, 1, 1], [0], [0]>} : vector<2x8x16xbf16>, vector<2x8x16xbf16>, vector<2x8x8xf32> -> vector<2x8x8xf32>
    "tpu.trace_stop"() : () -> ()
    %33 = vector.broadcast %26 : vector<2x1x8xf32> to vector<2x8x8xf32>
    %34 = arith.addf %32, %33 : vector<2x8x8xf32>
    %cst_17 = arith.constant dense<0xFF800000> : vector<2x8xf32>
    %35 = vector.multi_reduction <maximumf>, %34, %cst_17 [2] : vector<2x8x8xf32> to vector<2x8xf32>
    %36 = vector.shape_cast %35 : vector<2x8xf32> to vector<2x8x1xf32>
    %37 = vector.broadcast %36 : vector<2x8x1xf32> to vector<2x8x8xf32>
    %38 = arith.subf %34, %37 : vector<2x8x8xf32>
    %39 = math.exp %38 : vector<2x8x8xf32>
    %cst_18 = arith.constant dense<0.000000e+00> : vector<2x8xf32>
    %40 = vector.multi_reduction <add>, %39, %cst_18 [2] : vector<2x8x8xf32> to vector<2x8xf32>
    %41 = vector.shape_cast %40 : vector<2x8xf32> to vector<2x8x1xf32>
    %42 = tpu.reciprocal %41 {approx = true} : vector<2x8x1xf32> -> vector<2x8x1xf32>
    %43 = vector.broadcast %42 : vector<2x8x1xf32> to vector<2x8x8xf32>
    %44 = arith.mulf %39, %43 : vector<2x8x8xf32>
    %45 = arith.truncf %44 : vector<2x8x8xf32> to vector<2x8x8xbf16>
    %46 = vector.extract_strided_slice %24 {offsets = [0, 0, 0], sizes = [2, 8, 16], strides = [1, 1, 1]} : vector<2x8x32xbf16> to vector<2x8x16xbf16>
    "tpu.trace_start"() <{level = 10 : i32, message = "bqk,bkd->bqd"}> : () -> ()
    %cst_19 = arith.constant dense<0.000000e+00> : vector<2x8x16xf32>
    %47 = tpu.matmul %45, %46, %cst_19 {dimension_numbers = #tpu.dot_dimension_numbers<[2], [1], [1], [2], [0, 0, 0, 1, 1, 2], [0], [0]>} : vector<2x8x8xbf16>, vector<2x8x16xbf16>, vector<2x8x16xf32> -> vector<2x8x16xf32>
    "tpu.trace_stop"() : () -> ()
    %48 = vector.shape_cast %47 : vector<2x8x16xf32> to vector<16x16xf32>
    %49 = vector.extract_strided_slice %28 {offsets = [0, 0], sizes = [16, 32], strides = [1, 1]} : vector<32x32xbf16> to vector<16x32xbf16>
    %50 = arith.truncf %48 : vector<16x16xf32> to vector<16x16xbf16>
    %cst_20 = arith.constant dense<0.000000e+00> : vector<16x32xf32>
    %51 = tpu.matmul %50, %49, %cst_20 {dimension_numbers = #tpu.dot_dimension_numbers<[1], [0], [0], [1], [0, 0, 1, 1], [], []>} : vector<16x16xbf16>, vector<16x32xbf16>, vector<16x32xf32> -> vector<16x32xf32>
    %52 = arith.addf %29, %51 : vector<16x32xf32>
    %53 = vector.extract_strided_slice %18 {offsets = [0, 0, 16], sizes = [2, 8, 16], strides = [1, 1, 1]} : vector<2x8x32xbf16> to vector<2x8x16xbf16>
    %54 = vector.extract_strided_slice %21 {offsets = [0, 0, 16], sizes = [2, 8, 16], strides = [1, 1, 1]} : vector<2x8x32xbf16> to vector<2x8x16xbf16>
    "tpu.trace_start"() <{level = 10 : i32, message = "bqd,bkd->bqk"}> : () -> ()
    %cst_21 = arith.constant dense<0.000000e+00> : vector<2x8x8xf32>
    %55 = tpu.matmul %53, %54, %cst_21 {dimension_numbers = #tpu.dot_dimension_numbers<[2], [2], [1], [1], [0, 0, 0, 1, 1, 1], [0], [0]>} : vector<2x8x16xbf16>, vector<2x8x16xbf16>, vector<2x8x8xf32> -> vector<2x8x8xf32>
    "tpu.trace_stop"() : () -> ()
    %56 = vector.broadcast %26 : vector<2x1x8xf32> to vector<2x8x8xf32>
    %57 = arith.addf %55, %56 : vector<2x8x8xf32>
    %cst_22 = arith.constant dense<0xFF800000> : vector<2x8xf32>
    %58 = vector.multi_reduction <maximumf>, %57, %cst_22 [2] : vector<2x8x8xf32> to vector<2x8xf32>
    %59 = vector.shape_cast %58 : vector<2x8xf32> to vector<2x8x1xf32>
    %60 = vector.broadcast %59 : vector<2x8x1xf32> to vector<2x8x8xf32>
    %61 = arith.subf %57, %60 : vector<2x8x8xf32>
    %62 = math.exp %61 : vector<2x8x8xf32>
    %cst_23 = arith.constant dense<0.000000e+00> : vector<2x8xf32>
    %63 = vector.multi_reduction <add>, %62, %cst_23 [2] : vector<2x8x8xf32> to vector<2x8xf32>
    %64 = vector.shape_cast %63 : vector<2x8xf32> to vector<2x8x1xf32>
    %65 = tpu.reciprocal %64 {approx = true} : vector<2x8x1xf32> -> vector<2x8x1xf32>
    %66 = vector.broadcast %65 : vector<2x8x1xf32> to vector<2x8x8xf32>
    %67 = arith.mulf %62, %66 : vector<2x8x8xf32>
    %68 = arith.truncf %67 : vector<2x8x8xf32> to vector<2x8x8xbf16>
    %69 = vector.extract_strided_slice %24 {offsets = [0, 0, 16], sizes = [2, 8, 16], strides = [1, 1, 1]} : vector<2x8x32xbf16> to vector<2x8x16xbf16>
    "tpu.trace_start"() <{level = 10 : i32, message = "bqk,bkd->bqd"}> : () -> ()
    %cst_24 = arith.constant dense<0.000000e+00> : vector<2x8x16xf32>
    %70 = tpu.matmul %68, %69, %cst_24 {dimension_numbers = #tpu.dot_dimension_numbers<[2], [1], [1], [2], [0, 0, 0, 1, 1, 2], [0], [0]>} : vector<2x8x8xbf16>, vector<2x8x16xbf16>, vector<2x8x16xf32> -> vector<2x8x16xf32>
    "tpu.trace_stop"() : () -> ()
    %71 = vector.shape_cast %70 : vector<2x8x16xf32> to vector<16x16xf32>
    %72 = vector.extract_strided_slice %28 {offsets = [16, 0], sizes = [16, 32], strides = [1, 1]} : vector<32x32xbf16> to vector<16x32xbf16>
    %73 = arith.truncf %71 : vector<16x16xf32> to vector<16x16xbf16>
    %cst_25 = arith.constant dense<0.000000e+00> : vector<16x32xf32>
    %74 = tpu.matmul %73, %72, %cst_25 {dimension_numbers = #tpu.dot_dimension_numbers<[1], [0], [0], [1], [0, 0, 1, 1], [], []>} : vector<16x16xbf16>, vector<16x32xbf16>, vector<16x32xf32> -> vector<16x32xf32>
    %75 = arith.addf %52, %74 : vector<16x32xf32>
    %c0_26 = arith.constant 0 : index
    %c0_27 = arith.constant 0 : index
    %c0_28 = arith.constant 0 : index
    %76 = vector.load %arg10[%c0_26, %c0_27, %c0_28] : memref<1x1x32xf32, #tpu.memory_space<vmem>>, vector<1x1x32xf32>
    %77 = vector.shape_cast %76 : vector<1x1x32xf32> to vector<1x32xf32>
    %78 = vector.broadcast %77 : vector<1x32xf32> to vector<16x32xf32>
    %79 = arith.addf %75, %78 : vector<16x32xf32>
    %80 = arith.addf %3, %79 : vector<16x32xf32>
    %c0_29 = arith.constant 0 : index
    %c0_30 = arith.constant 0 : index
    %c0_31 = arith.constant 0 : index
    %81 = vector.load %arg11[%c0_29, %c0_30, %c0_31] : memref<1x1x32xf32, #tpu.memory_space<vmem>>, vector<1x1x32xf32>
    %82 = vector.shape_cast %81 : vector<1x1x32xf32> to vector<1x32xf32>
    %c0_32 = arith.constant 0 : index
    %c0_33 = arith.constant 0 : index
    %c0_34 = arith.constant 0 : index
    %83 = vector.load %arg12[%c0_32, %c0_33, %c0_34] : memref<1x1x32xf32, #tpu.memory_space<vmem>>, vector<1x1x32xf32>
    %84 = vector.shape_cast %83 : vector<1x1x32xf32> to vector<1x32xf32>
    %cst_35 = arith.constant dense<0.000000e+00> : vector<16xf32>
    %85 = vector.multi_reduction <add>, %80, %cst_35 [1] : vector<16x32xf32> to vector<16xf32>
    %86 = vector.shape_cast %85 : vector<16xf32> to vector<16x1xf32>
    %cst_36 = arith.constant 3.200000e+01 : f32
    %87 = vector.broadcast %cst_36 : f32 to vector<16x1xf32>
    %88 = arith.divf %86, %87 : vector<16x1xf32>
    %89 = vector.broadcast %88 : vector<16x1xf32> to vector<16x32xf32>
    %90 = arith.subf %80, %89 : vector<16x32xf32>
    %91 = arith.mulf %90, %90 : vector<16x32xf32>
    %cst_37 = arith.constant dense<0.000000e+00> : vector<16xf32>
    %92 = vector.multi_reduction <add>, %91, %cst_37 [1] : vector<16x32xf32> to vector<16xf32>
    %93 = vector.shape_cast %92 : vector<16xf32> to vector<16x1xf32>
    %cst_38 = arith.constant 3.200000e+01 : f32
    %94 = vector.broadcast %cst_38 : f32 to vector<16x1xf32>
    %95 = arith.divf %93, %94 : vector<16x1xf32>
    %96 = vector.broadcast %88 : vector<16x1xf32> to vector<16x32xf32>
    %97 = arith.subf %80, %96 : vector<16x32xf32>
    %cst_39 = arith.constant 9.99999996E-13 : f32
    %98 = vector.broadcast %cst_39 : f32 to vector<16x1xf32>
    %99 = arith.addf %95, %98 : vector<16x1xf32>
    %100 = math.rsqrt %99 : vector<16x1xf32>
    %101 = vector.broadcast %100 : vector<16x1xf32> to vector<16x32xf32>
    %102 = arith.mulf %97, %101 : vector<16x32xf32>
    %103 = vector.broadcast %82 : vector<1x32xf32> to vector<16x32xf32>
    %104 = arith.mulf %102, %103 : vector<16x32xf32>
    %105 = vector.broadcast %84 : vector<1x32xf32> to vector<16x32xf32>
    %106 = arith.addf %104, %105 : vector<16x32xf32>
    %c0_40 = arith.constant 0 : index
    %c0_41 = arith.constant 0 : index
    %c0_42 = arith.constant 0 : index
    %107 = vector.load %arg13[%c0_40, %c0_41, %c0_42] : memref<1x32x64xbf16, #tpu.memory_space<vmem>>, vector<1x32x64xbf16>
    %108 = vector.shape_cast %107 : vector<1x32x64xbf16> to vector<32x64xbf16>
    %109 = arith.truncf %106 : vector<16x32xf32> to vector<16x32xbf16>
    %cst_43 = arith.constant dense<0.000000e+00> : vector<16x64xf32>
    %110 = tpu.matmul %109, %108, %cst_43 {dimension_numbers = #tpu.dot_dimension_numbers<[1], [0], [0], [1], [0, 0, 1, 1], [], []>} : vector<16x32xbf16>, vector<32x64xbf16>, vector<16x64xf32> -> vector<16x64xf32>
    %c0_44 = arith.constant 0 : index
    %c0_45 = arith.constant 0 : index
    %c0_46 = arith.constant 0 : index
    %111 = vector.load %arg14[%c0_44, %c0_45, %c0_46] : memref<1x1x64xf32, #tpu.memory_space<vmem>>, vector<1x1x64xf32>
    %112 = vector.shape_cast %111 : vector<1x1x64xf32> to vector<1x64xf32>
    %113 = vector.broadcast %112 : vector<1x64xf32> to vector<16x64xf32>
    %114 = arith.addf %110, %113 : vector<16x64xf32>
    %115 = arith.mulf %114, %114 : vector<16x64xf32>
    %116 = arith.mulf %114, %115 : vector<16x64xf32>
    %cst_47 = arith.constant 4.471500e-02 : f32
    %117 = vector.broadcast %cst_47 : f32 to vector<16x64xf32>
    %118 = arith.mulf %117, %116 : vector<16x64xf32>
    %119 = arith.addf %114, %118 : vector<16x64xf32>
    %cst_48 = arith.constant 0.797884583 : f32
    %120 = vector.broadcast %cst_48 : f32 to vector<16x64xf32>
    %121 = arith.mulf %120, %119 : vector<16x64xf32>
    %122 = math.tanh %121 : vector<16x64xf32>
    %cst_49 = arith.constant 1.000000e+00 : f32
    %123 = vector.broadcast %cst_49 : f32 to vector<16x64xf32>
    %124 = arith.addf %123, %122 : vector<16x64xf32>
    %cst_50 = arith.constant 5.000000e-01 : f32
    %125 = vector.broadcast %cst_50 : f32 to vector<16x64xf32>
    %126 = arith.mulf %125, %124 : vector<16x64xf32>
    %127 = arith.mulf %114, %126 : vector<16x64xf32>
    %c0_51 = arith.constant 0 : index
    %c0_52 = arith.constant 0 : index
    %c0_53 = arith.constant 0 : index
    %128 = vector.load %arg15[%c0_51, %c0_52, %c0_53] : memref<1x64x32xbf16, #tpu.memory_space<vmem>>, vector<1x64x32xbf16>
    %129 = vector.shape_cast %128 : vector<1x64x32xbf16> to vector<64x32xbf16>
    %130 = arith.truncf %127 : vector<16x64xf32> to vector<16x64xbf16>
    %cst_54 = arith.constant dense<0.000000e+00> : vector<16x32xf32>
    %131 = tpu.matmul %130, %129, %cst_54 {dimension_numbers = #tpu.dot_dimension_numbers<[1], [0], [0], [1], [0, 0, 1, 1], [], []>} : vector<16x64xbf16>, vector<64x32xbf16>, vector<16x32xf32> -> vector<16x32xf32>
    %c0_55 = arith.constant 0 : index
    %c0_56 = arith.constant 0 : index
    %c0_57 = arith.constant 0 : index
    %132 = vector.load %arg16[%c0_55, %c0_56, %c0_57] : memref<1x1x32xf32, #tpu.memory_space<vmem>>, vector<1x1x32xf32>
    %133 = vector.shape_cast %132 : vector<1x1x32xf32> to vector<1x32xf32>
    %134 = vector.broadcast %133 : vector<1x32xf32> to vector<16x32xf32>
    %135 = arith.addf %131, %134 : vector<16x32xf32>
    %136 = arith.addf %106, %135 : vector<16x32xf32>
    %c0_58 = arith.constant 0 : index
    %c0_59 = arith.constant 0 : index
    %c0_60 = arith.constant 0 : index
    %137 = vector.load %arg17[%c0_58, %c0_59, %c0_60] : memref<1x1x32xf32, #tpu.memory_space<vmem>>, vector<1x1x32xf32>
    %138 = vector.shape_cast %137 : vector<1x1x32xf32> to vector<1x32xf32>
    %c0_61 = arith.constant 0 : index
    %c0_62 = arith.constant 0 : index
    %c0_63 = arith.constant 0 : index
    %139 = vector.load %arg18[%c0_61, %c0_62, %c0_63] : memref<1x1x32xf32, #tpu.memory_space<vmem>>, vector<1x1x32xf32>
    %140 = vector.shape_cast %139 : vector<1x1x32xf32> to vector<1x32xf32>
    %cst_64 = arith.constant dense<0.000000e+00> : vector<16xf32>
    %141 = vector.multi_reduction <add>, %136, %cst_64 [1] : vector<16x32xf32> to vector<16xf32>
    %142 = vector.shape_cast %141 : vector<16xf32> to vector<16x1xf32>
    %cst_65 = arith.constant 3.200000e+01 : f32
    %143 = vector.broadcast %cst_65 : f32 to vector<16x1xf32>
    %144 = arith.divf %142, %143 : vector<16x1xf32>
    %145 = vector.broadcast %144 : vector<16x1xf32> to vector<16x32xf32>
    %146 = arith.subf %136, %145 : vector<16x32xf32>
    %147 = arith.mulf %146, %146 : vector<16x32xf32>
    %cst_66 = arith.constant dense<0.000000e+00> : vector<16xf32>
    %148 = vector.multi_reduction <add>, %147, %cst_66 [1] : vector<16x32xf32> to vector<16xf32>
    %149 = vector.shape_cast %148 : vector<16xf32> to vector<16x1xf32>
    %cst_67 = arith.constant 3.200000e+01 : f32
    %150 = vector.broadcast %cst_67 : f32 to vector<16x1xf32>
    %151 = arith.divf %149, %150 : vector<16x1xf32>
    %152 = vector.broadcast %144 : vector<16x1xf32> to vector<16x32xf32>
    %153 = arith.subf %136, %152 : vector<16x32xf32>
    %cst_68 = arith.constant 9.99999996E-13 : f32
    %154 = vector.broadcast %cst_68 : f32 to vector<16x1xf32>
    %155 = arith.addf %151, %154 : vector<16x1xf32>
    %156 = math.rsqrt %155 : vector<16x1xf32>
    %157 = vector.broadcast %156 : vector<16x1xf32> to vector<16x32xf32>
    %158 = arith.mulf %153, %157 : vector<16x32xf32>
    %159 = vector.broadcast %138 : vector<1x32xf32> to vector<16x32xf32>
    %160 = arith.mulf %158, %159 : vector<16x32xf32>
    %161 = vector.broadcast %140 : vector<1x32xf32> to vector<16x32xf32>
    %162 = arith.addf %160, %161 : vector<16x32xf32>
    %c0_69 = arith.constant 0 : index
    %c0_70 = arith.constant 0 : index
    %163 = vector.load %arg20[%c0_69, %c0_70] : memref<16x32xf32, #tpu.memory_space<vmem>>, vector<16x32xf32>
    tpu.vector_store %arg20[%c0_69, %c0_70], %162 {strides = array<i32>} : memref<16x32xf32, #tpu.memory_space<vmem>>, vector<16x32xf32>,
    %c1_i32 = arith.constant 1 : i32
    %164 = arith.cmpi eq, %arg0, %c1_i32 : i32
    %165 = arith.extui %164 : i1 to i32
    %c0_i32_71 = arith.constant 0 : i32
    %166 = arith.cmpi ne, %165, %c0_i32_71 : i32
    scf.if %166 {
      %167 = vector.shape_cast %162 : vector<16x32xf32> to vector<2x8x32xf32>
      %168 = vector.extract_strided_slice %167 {offsets = [0, 0, 0], sizes = [2, 1, 32], strides = [1, 1, 1]} : vector<2x8x32xf32> to vector<2x1x32xf32>
      %169 = vector.shape_cast %168 : vector<2x1x32xf32> to vector<2x32xf32>
      %c0_72 = arith.constant 0 : index
      %c0_73 = arith.constant 0 : index
      %170 = vector.load %arg19[%c0_72, %c0_73] : memref<2x32xf32, #tpu.memory_space<vmem>>, vector<2x32xf32>
      tpu.vector_store %arg19[%c0_72, %c0_73], %169 {strides = array<i32>} : memref<2x32xf32, #tpu.memory_space<vmem>>, vector<2x32xf32>,
    } else {
    }
    return
  }
  func.func @transform_0(%arg0: i32) -> (i32, i32) {
    %c0_i32 = arith.constant 0 : i32
    %c0_i32_0 = arith.constant 0 : i32
    %c0_i32_1 = arith.constant 0 : i32
    return %c0_i32, %c0_i32_0 : i32, i32
  }
  func.func @transform_1(%arg0: i32) -> (i32, i32) {
    %c0_i32 = arith.constant 0 : i32
    %c0_i32_0 = arith.constant 0 : i32
    %c0_i32_1 = arith.constant 0 : i32
    return %c0_i32, %c0_i32_0 : i32, i32
  }
  func.func @transform_2(%arg0: i32) -> (i32, i32) {
    %c0_i32 = arith.constant 0 : i32
    %c0_i32_0 = arith.constant 0 : i32
    %c0_i32_1 = arith.constant 0 : i32
    return %c0_i32, %c0_i32_0 : i32, i32
  }
  func.func @transform_3(%arg0: i32) -> (i32, i32) {
    %c0_i32 = arith.constant 0 : i32
    %c0_i32_0 = arith.constant 0 : i32
    %c0_i32_1 = arith.constant 0 : i32
    return %c0_i32, %c0_i32_0 : i32, i32
  }
  func.func @transform_4(%arg0: i32) -> (i32, i32) {
    %c0_i32 = arith.constant 0 : i32
    %c0_i32_0 = arith.constant 0 : i32
    %c0_i32_1 = arith.constant 0 : i32
    return %c0_i32, %c0_i32_0 : i32, i32
  }
  func.func @transform_5(%arg0: i32) -> (i32, i32) {
    %c0_i32 = arith.constant 0 : i32
    %c0_i32_0 = arith.constant 0 : i32
    %c0_i32_1 = arith.constant 0 : i32
    return %c0_i32, %c0_i32_0 : i32, i32
  }
  func.func @transform_6(%arg0: i32) -> (i32, i32, i32) {
    %c0_i32 = arith.constant 0 : i32
    %c0_i32_0 = arith.constant 0 : i32
    %c0_i32_1 = arith.constant 0 : i32
    return %arg0, %c0_i32, %c0_i32_0 : i32, i32, i32
  }
  func.func @transform_7(%arg0: i32) -> (i32, i32, i32) {
    %c0_i32 = arith.constant 0 : i32
    %c0_i32_0 = arith.constant 0 : i32
    %c0_i32_1 = arith.constant 0 : i32
    return %arg0, %c0_i32, %c0_i32_0 : i32, i32, i32
  }
  func.func @transform_8(%arg0: i32) -> (i32, i32, i32) {
    %c0_i32 = arith.constant 0 : i32
    %c0_i32_0 = arith.constant 0 : i32
    %c0_i32_1 = arith.constant 0 : i32
    return %arg0, %c0_i32, %c0_i32_0 : i32, i32, i32
  }
  func.func @transform_9(%arg0: i32) -> (i32, i32, i32) {
    %c0_i32 = arith.constant 0 : i32
    %c0_i32_0 = arith.constant 0 : i32
    %c0_i32_1 = arith.constant 0 : i32
    return %arg0, %c0_i32, %c0_i32_0 : i32, i32, i32
  }
  func.func @transform_10(%arg0: i32) -> (i32, i32, i32) {
    %c0_i32 = arith.constant 0 : i32
    %c0_i32_0 = arith.constant 0 : i32
    %c0_i32_1 = arith.constant 0 : i32
    return %arg0, %c0_i32, %c0_i32_0 : i32, i32, i32
  }
  func.func @transform_11(%arg0: i32) -> (i32, i32, i32) {
    %c0_i32 = arith.constant 0 : i32
    %c0_i32_0 = arith.constant 0 : i32
    %c0_i32_1 = arith.constant 0 : i32
    return %arg0, %c0_i32, %c0_i32_0 : i32, i32, i32
  }
  func.func @transform_12(%arg0: i32) -> (i32, i32, i32) {
    %c0_i32 = arith.constant 0 : i32
    %c0_i32_0 = arith.constant 0 : i32
    %c0_i32_1 = arith.constant 0 : i32
    return %arg0, %c0_i32, %c0_i32_0 : i32, i32, i32
  }
  func.func @transform_13(%arg0: i32) -> (i32, i32, i32) {
    %c0_i32 = arith.constant 0 : i32
    %c0_i32_0 = arith.constant 0 : i32
    %c0_i32_1 = arith.constant 0 : i32
    return %arg0, %c0_i32, %c0_i32_0 : i32, i32, i32
  }
  func.func @transform_14(%arg0: i32) -> (i32, i32, i32) {
    %c0_i32 = arith.constant 0 : i32
    %c0_i32_0 = arith.constant 0 : i32
    %c0_i32_1 = arith.constant 0 : i32
    return %arg0, %c0_i32, %c0_i32_0 : i32, i32, i32
  }
  func.func @transform_15(%arg0: i32) -> (i32, i32, i32) {
    %c0_i32 = arith.constant 0 : i32
    %c0_i32_0 = arith.constant 0 : i32
    %c0_i32_1 = arith.constant 0 : i32
    return %arg0, %c0_i32, %c0_i32_0 : i32, i32, i32
  }
  func.func @transform_16(%arg0: i32) -> (i32, i32, i32) {
    %c0_i32 = arith.constant 0 : i32
    %c0_i32_0 = arith.constant 0 : i32
    %c0_i32_1 = arith.constant 0 : i32
    return %arg0, %c0_i32, %c0_i32_0 : i32, i32, i32
  }
  func.func @transform_17(%arg0: i32) -> (i32, i32, i32) {
    %c0_i32 = arith.constant 0 : i32
    %c0_i32_0 = arith.constant 0 : i32
    %c0_i32_1 = arith.constant 0 : i32
    return %arg0, %c0_i32, %c0_i32_0 : i32, i32, i32
  }
  func.func @transform_18(%arg0: i32) -> (i32, i32) {
    %c0_i32 = arith.constant 0 : i32
    %c0_i32_0 = arith.constant 0 : i32
    %c0_i32_1 = arith.constant 0 : i32
    return %c0_i32, %c0_i32_0 : i32, i32
  }
}

</mosaic_0001>

<llo_original>
// kernel: bioclinicalbert_ft_forward.1
$region0: #{bioclinicalbert_ft_forward.1}
  #allocation0 [shape = 'u32[]', space=smem, size = 0x4, offset = 0x4, fixed_abs, tag = 'smem constant byte address 0x4 - core index']
  #allocation1 [shape = 'u32[72,128]{1,0:T(1,128)}', space=vmem, size = 0x9000, scoped, tag = 'internal scratch']
  #allocation2 [shape = 'f32[16,32]{1,0:T(8,128)}', space=vmem, size = 0x2000, scoped, tag = 'scratch operand']
  %s0 = inlined_call_operand.vmem [shape: s32[16,1], index: 0, kind: input, shape index: {}]
  %s1 = inlined_call_operand.vmem [shape: bf16[64,32], index: 1, kind: input, shape index: {}]
  %s2 = inlined_call_operand.vmem [shape: f32[16,32], index: 2, kind: input, shape index: {}]
  %s3 = inlined_call_operand.vmem [shape: f32[1,32], index: 3, kind: input, shape index: {}]
  %s4 = inlined_call_operand.vmem [shape: f32[1,32], index: 4, kind: input, shape index: {}]
  %s5 = inlined_call_operand.vmem [shape: f32[2,8], index: 5, kind: input, shape index: {}]
  %s6 = inlined_call_operand.vmem [shape: bf16[2,32,96], index: 6, kind: input, shape index: {}]
  %s7 = inlined_call_operand.vmem [shape: f32[2,1,96], index: 7, kind: input, shape index: {}]
  %s8 = inlined_call_operand.vmem [shape: bf16[2,32,32], index: 8, kind: input, shape index: {}]
  %s9 = inlined_call_operand.vmem [shape: f32[2,1,32], index: 9, kind: input, shape index: {}]
  %s10 = inlined_call_operand.vmem [shape: f32[2,1,32], index: 10, kind: input, shape index: {}]
  %s11 = inlined_call_operand.vmem [shape: f32[2,1,32], index: 11, kind: input, shape index: {}]
  %s12 = inlined_call_operand.vmem [shape: bf16[2,32,64], index: 12, kind: input, shape index: {}]
  %s13 = inlined_call_operand.vmem [shape: f32[2,1,64], index: 13, kind: input, shape index: {}]
  %s14 = inlined_call_operand.vmem [shape: bf16[2,64,32], index: 14, kind: input, shape index: {}]
  %s15 = inlined_call_operand.vmem [shape: f32[2,1,32], index: 15, kind: input, shape index: {}]
  %s16 = inlined_call_operand.vmem [shape: f32[2,1,32], index: 16, kind: input, shape index: {}]
  %s17 = inlined_call_operand.vmem [shape: f32[2,1,32], index: 17, kind: input, shape index: {}]
  %s18 = inlined_call_operand.hbm [shape: f32[2,32], index: 18, kind: output, shape index: {}]
  %s19 = sld [smem:[#allocation0]]
  $region113: #{bioclinicalbert_ft_forward.1} parent=0
    _
  %s21 = ssub.s32 1, %s19
  %s22 = scalar_select 0, %s21, %s19
  $region1: #{bioclinicalbert_ft_forward.1} parent=0
    #allocation3 [shape = 'u8[1024]{0}', space=vmem, size = 0x400, scoped, tag = 'output window, operand 0, single buffered']
    #allocation4 [shape = 's32[2]{0}', space=sflag, size = 0x8, scoped, tag = 'scoped memory for bioclinicalbert_ft_forward.1']
    %23 = vsyncpa [#allocation4], 0
    loop: start=0, step=1, limit=4
    $region2: #{bioclinicalbert_ft_forward.1} parent=1 // loop_pre_header
      _
    $region3: #{bioclinicalbert_ft_forward.1} parent=1 // loop_header
      %s25 = sphi 0, %s29
      %p26 = scmp.ge.s32.totalorder %s25, 4
      %s33 = sphi 0, %s33
      %s35 = sphi 0, %s33
      %s36 = sphi 0, %s35
      %s50 = sphi 0, %s36
      %s54 = sphi 0, %s54
      %s56 = sphi 0, %s54
      %s57 = sphi 0, %s56
      %s71 = sphi 0, %s57
      %s75 = sphi 0, %s75
      %s77 = sphi 0, %s75
      %s78 = sphi 0, %s77
      %s92 = sphi 0, %s78
      %s96 = sphi 0, %s96
      %s98 = sphi 0, %s96
      %s99 = sphi 0, %s98
      %s113 = sphi 0, %s99
      %s117 = sphi 0, %s117
      %s119 = sphi 0, %s117
      %s120 = sphi 0, %s119
      %s134 = sphi 0, %s120
      %s138 = sphi 0, %s138
      %s140 = sphi 0, %s138
      %s141 = sphi 0, %s140
      %s155 = sphi 0, %s141
      %s161 = sphi 0, %s163
      %s164 = sphi 0, %s161
      %s165 = sphi 0, %s164
      %s181 = sphi 0, %s165
      %s187 = sphi 0, %s189
      %s190 = sphi 0, %s187
      %s191 = sphi 0, %s190
      %s207 = sphi 0, %s191
      %s213 = sphi 0, %s215
      %s216 = sphi 0, %s213
      %s217 = sphi 0, %s216
      %s233 = sphi 0, %s217
      %s239 = sphi 0, %s241
      %s242 = sphi 0, %s239
      %s243 = sphi 0, %s242
      %s259 = sphi 0, %s243
      %s265 = sphi 0, %s267
      %s268 = sphi 0, %s265
      %s269 = sphi 0, %s268
      %s285 = sphi 0, %s269
      %s291 = sphi 0, %s293
      %s294 = sphi 0, %s291
      %s295 = sphi 0, %s294
      %s311 = sphi 0, %s295
      %s317 = sphi 0, %s319
      %s320 = sphi 0, %s317
      %s321 = sphi 0, %s320
      %s337 = sphi 0, %s321
      %s343 = sphi 0, %s345
      %s346 = sphi 0, %s343
      %s347 = sphi 0, %s346
      %s363 = sphi 0, %s347
      %s369 = sphi 0, %s371
      %s372 = sphi 0, %s369
      %s373 = sphi 0, %s372
      %s389 = sphi 0, %s373
      %s395 = sphi 0, %s397
      %s398 = sphi 0, %s395
      %s399 = sphi 0, %s398
      %s415 = sphi 0, %s399
      %s421 = sphi 0, %s423
      %s424 = sphi 0, %s421
      %s425 = sphi 0, %s424
      %s441 = sphi 0, %s425
      %s447 = sphi 0, %s449
      %s450 = sphi 0, %s447
      %s451 = sphi 0, %s450
      %s467 = sphi 0, %s451
      %s471 = sphi 0, %s471
      %s473 = sphi 0, %s471
      %s474 = sphi 0, %s473
      %s488 = sphi 0, %s474
    $region4: #{bioclinicalbert_ft_forward.1} parent=1 // loop_header_branch
      %28 = sbr.rel (%p26) target = $region8
    $region5: #{bioclinicalbert_ft_forward.1} parent=1 // loop_body
      %s30 = ssub.s32 %s25, 1
      %s31 = ssub.s32 %s25, 2
      %s32 = sadd.s32 %s25, 1
      %s34 = sadd.s32 %s33, 1
      %p37 = scmp.eq.s32.totalorder %s25, 1
      %p38 = scmp.ne.s32.totalorder %s33, %s35
      %p39 = scmp.eq.s32.totalorder %s25, 0
      %p40 = por %p38, %p39
      %p41 = scmp.ne.s32.totalorder %s33, %s35
      %p42 = scmp.eq.s32.totalorder %s30, 1
      %p43 = por %p41, %p42
      %p44 = scmp.ne.s32.totalorder %s35, %s36
      %p45 = scmp.eq.s32.totalorder %s30, 0
      %p46 = por %p44, %p45
      %p47 = scmp.ne.s32.totalorder %s35, %s36
      %p48 = scmp.eq.s32.totalorder %s31, 1
      %p49 = por %p47, %p48
      %p51 = scmp.ne.s32.totalorder %s36, %s50
      %p52 = scmp.eq.s32.totalorder %s31, 0
      %p53 = por %p51, %p52
      %s55 = sadd.s32 %s54, 1
      %p58 = scmp.eq.s32.totalorder %s25, 1
      %p59 = scmp.ne.s32.totalorder %s54, %s56
      %p60 = scmp.eq.s32.totalorder %s25, 0
      %p61 = por %p59, %p60
      %p62 = scmp.ne.s32.totalorder %s54, %s56
      %p63 = scmp.eq.s32.totalorder %s30, 1
      %p64 = por %p62, %p63
      %p65 = scmp.ne.s32.totalorder %s56, %s57
      %p66 = scmp.eq.s32.totalorder %s30, 0
      %p67 = por %p65, %p66
      %p68 = scmp.ne.s32.totalorder %s56, %s57
      %p69 = scmp.eq.s32.totalorder %s31, 1
      %p70 = por %p68, %p69
      %p72 = scmp.ne.s32.totalorder %s57, %s71
      %p73 = scmp.eq.s32.totalorder %s31, 0
      %p74 = por %p72, %p73
      %s76 = sadd.s32 %s75, 1
      %p79 = scmp.eq.s32.totalorder %s25, 1
      %p80 = scmp.ne.s32.totalorder %s75, %s77
      %p81 = scmp.eq.s32.totalorder %s25, 0
      %p82 = por %p80, %p81
      %p83 = scmp.ne.s32.totalorder %s75, %s77
      %p84 = scmp.eq.s32.totalorder %s30, 1
      %p85 = por %p83, %p84
      %p86 = scmp.ne.s32.totalorder %s77, %s78
      %p87 = scmp.eq.s32.totalorder %s30, 0
      %p88 = por %p86, %p87
      %p89 = scmp.ne.s32.totalorder %s77, %s78
      %p90 = scmp.eq.s32.totalorder %s31, 1
      %p91 = por %p89, %p90
      %p93 = scmp.ne.s32.totalorder %s78, %s92
      %p94 = scmp.eq.s32.totalorder %s31, 0
      %p95 = por %p93, %p94
      %s97 = sadd.s32 %s96, 1
      %p100 = scmp.eq.s32.totalorder %s25, 1
      %p101 = scmp.ne.s32.totalorder %s96, %s98
      %p102 = scmp.eq.s32.totalorder %s25, 0
      %p103 = por %p101, %p102
      %p104 = scmp.ne.s32.totalorder %s96, %s98
      %p105 = scmp.eq.s32.totalorder %s30, 1
      %p106 = por %p104, %p105
      %p107 = scmp.ne.s32.totalorder %s98, %s99
      %p108 = scmp.eq.s32.totalorder %s30, 0
      %p109 = por %p107, %p108
      %p110 = scmp.ne.s32.totalorder %s98, %s99
      %p111 = scmp.eq.s32.totalorder %s31, 1
      %p112 = por %p110, %p111
      %p114 = scmp.ne.s32.totalorder %s99, %s113
      %p115 = scmp.eq.s32.totalorder %s31, 0
      %p116 = por %p114, %p115
      %s118 = sadd.s32 %s117, 1
      %p121 = scmp.eq.s32.totalorder %s25, 1
      %p122 = scmp.ne.s32.totalorder %s117, %s119
      %p123 = scmp.eq.s32.totalorder %s25, 0
      %p124 = por %p122, %p123
      %p125 = scmp.ne.s32.totalorder %s117, %s119
      %p126 = scmp.eq.s32.totalorder %s30, 1
      %p127 = por %p125, %p126
      %p128 = scmp.ne.s32.totalorder %s119, %s120
      %p129 = scmp.eq.s32.totalorder %s30, 0
      %p130 = por %p128, %p129
      %p131 = scmp.ne.s32.totalorder %s119, %s120
      %p132 = scmp.eq.s32.totalorder %s31, 1
      %p133 = por %p131, %p132
      %p135 = scmp.ne.s32.totalorder %s120, %s134
      %p136 = scmp.eq.s32.totalorder %s31, 0
      %p137 = por %p135, %p136
      %s139 = sadd.s32 %s138, 1
      %p142 = scmp.eq.s32.totalorder %s25, 1
      %p143 = scmp.ne.s32.totalorder %s138, %s140
      %p144 = scmp.eq.s32.totalorder %s25, 0
      %p145 = por %p143, %p144
      %p146 = scmp.ne.s32.totalorder %s138, %s140
      %p147 = scmp.eq.s32.totalorder %s30, 1
      %p148 = por %p146, %p147
      %p149 = scmp.ne.s32.totalorder %s140, %s141
      %p150 = scmp.eq.s32.totalorder %s30, 0
      %p151 = por %p149, %p150
      %p152 = scmp.ne.s32.totalorder %s140, %s141
      %p153 = scmp.eq.s32.totalorder %s31, 1
      %p154 = por %p152, %p153
      %p156 = scmp.ne.s32.totalorder %s141, %s155
      %p157 = scmp.eq.s32.totalorder %s31, 0
      %p158 = por %p156, %p157
      %s159 = ssub.s32 %s25, %s32
      %p160 = scmp.eq.s32.totalorder %s159, 0
      %s162 = sadd.s32 %s161, 1
      %s163 = scalar_select %p160, %s161, %s162
      %p166 = pneg %p160
      %p167 = scmp.eq.s32.totalorder %s25, 1
      %p168 = por %p166, %p167
      %p169 = scmp.ne.s32.totalorder %s161, %s164
      %p170 = scmp.eq.s32.totalorder %s25, 0
      %p171 = por %p169, %p170
      %p172 = scmp.ne.s32.totalorder %s161, %s164
      %p173 = scmp.eq.s32.totalorder %s30, 1
      %p174 = por %p172, %p173
      %p175 = scmp.ne.s32.totalorder %s164, %s165
      %p176 = scmp.eq.s32.totalorder %s30, 0
      %p177 = por %p175, %p176
      %p178 = scmp.ne.s32.totalorder %s164, %s165
      %p179 = scmp.eq.s32.totalorder %s31, 1
      %p180 = por %p178, %p179
      %p182 = scmp.ne.s32.totalorder %s165, %s181
      %p183 = scmp.eq.s32.totalorder %s31, 0
      %p184 = por %p182, %p183
      %s185 = ssub.s32 %s25, %s32
      %p186 = scmp.eq.s32.totalorder %s185, 0
      %s188 = sadd.s32 %s187, 1
      %s189 = scalar_select %p186, %s187, %s188
      %p192 = pneg %p186
      %p193 = scmp.eq.s32.totalorder %s25, 1
      %p194 = por %p192, %p193
      %p195 = scmp.ne.s32.totalorder %s187, %s190
      %p196 = scmp.eq.s32.totalorder %s25, 0
      %p197 = por %p195, %p196
      %p198 = scmp.ne.s32.totalorder %s187, %s190
      %p199 = scmp.eq.s32.totalorder %s30, 1
      %p200 = por %p198, %p199
      %p201 = scmp.ne.s32.totalorder %s190, %s191
      %p202 = scmp.eq.s32.totalorder %s30, 0
      %p203 = por %p201, %p202
      %p204 = scmp.ne.s32.totalorder %s190, %s191
      %p205 = scmp.eq.s32.totalorder %s31, 1
      %p206 = por %p204, %p205
      %p208 = scmp.ne.s32.totalorder %s191, %s207
      %p209 = scmp.eq.s32.totalorder %s31, 0
      %p210 = por %p208, %p209
      %s211 = ssub.s32 %s25, %s32
      %p212 = scmp.eq.s32.totalorder %s211, 0
      %s214 = sadd.s32 %s213, 1
      %s215 = scalar_select %p212, %s213, %s214
      %p218 = pneg %p212
      %p219 = scmp.eq.s32.totalorder %s25, 1
      %p220 = por %p218, %p219
      %p221 = scmp.ne.s32.totalorder %s213, %s216
      %p222 = scmp.eq.s32.totalorder %s25, 0
      %p223 = por %p221, %p222
      %p224 = scmp.ne.s32.totalorder %s213, %s216
      %p225 = scmp.eq.s32.totalorder %s30, 1
      %p226 = por %p224, %p225
      %p227 = scmp.ne.s32.totalorder %s216, %s217
      %p228 = scmp.eq.s32.totalorder %s30, 0
      %p229 = por %p227, %p228
      %p230 = scmp.ne.s32.totalorder %s216, %s217
      %p231 = scmp.eq.s32.totalorder %s31, 1
      %p232 = por %p230, %p231
      %p234 = scmp.ne.s32.totalorder %s217, %s233
      %p235 = scmp.eq.s32.totalorder %s31, 0
      %p236 = por %p234, %p235
      %s237 = ssub.s32 %s25, %s32
      %p238 = scmp.eq.s32.totalorder %s237, 0
      %s240 = sadd.s32 %s239, 1
      %s241 = scalar_select %p238, %s239, %s240
      %p244 = pneg %p238
      %p245 = scmp.eq.s32.totalorder %s25, 1
      %p246 = por %p244, %p245
      %p247 = scmp.ne.s32.totalorder %s239, %s242
      %p248 = scmp.eq.s32.totalorder %s25, 0
      %p249 = por %p247, %p248
      %p250 = scmp.ne.s32.totalorder %s239, %s242
      %p251 = scmp.eq.s32.totalorder %s30, 1
      %p252 = por %p250, %p251
      %p253 = scmp.ne.s32.totalorder %s242, %s243
      %p254 = scmp.eq.s32.totalorder %s30, 0
      %p255 = por %p253, %p254
      %p256 = scmp.ne.s32.totalorder %s242, %s243
      %p257 = scmp.eq.s32.totalorder %s31, 1
      %p258 = por %p256, %p257
      %p260 = scmp.ne.s32.totalorder %s243, %s259
      %p261 = scmp.eq.s32.totalorder %s31, 0
      %p262 = por %p260, %p261
      %s263 = ssub.s32 %s25, %s32
      %p264 = scmp.eq.s32.totalorder %s263, 0
      %s266 = sadd.s32 %s265, 1
      %s267 = scalar_select %p264, %s265, %s266
      %p270 = pneg %p264
      %p271 = scmp.eq.s32.totalorder %s25, 1
      %p272 = por %p270, %p271
      %p273 = scmp.ne.s32.totalorder %s265, %s268
      %p274 = scmp.eq.s32.totalorder %s25, 0
      %p275 = por %p273, %p274
      %p276 = scmp.ne.s32.totalorder %s265, %s268
      %p277 = scmp.eq.s32.totalorder %s30, 1
      %p278 = por %p276, %p277
      %p279 = scmp.ne.s32.totalorder %s268, %s269
      %p280 = scmp.eq.s32.totalorder %s30, 0
      %p281 = por %p279, %p280
      %p282 = scmp.ne.s32.totalorder %s268, %s269
      %p283 = scmp.eq.s32.totalorder %s31, 1
      %p284 = por %p282, %p283
      %p286 = scmp.ne.s32.totalorder %s269, %s285
      %p287 = scmp.eq.s32.totalorder %s31, 0
      %p288 = por %p286, %p287
      %s289 = ssub.s32 %s25, %s32
      %p290 = scmp.eq.s32.totalorder %s289, 0
      %s292 = sadd.s32 %s291, 1
      %s293 = scalar_select %p290, %s291, %s292
      %p296 = pneg %p290
      %p297 = scmp.eq.s32.totalorder %s25, 1
      %p298 = por %p296, %p297
      %p299 = scmp.ne.s32.totalorder %s291, %s294
      %p300 = scmp.eq.s32.totalorder %s25, 0
      %p301 = por %p299, %p300
      %p302 = scmp.ne.s32.totalorder %s291, %s294
      %p303 = scmp.eq.s32.totalorder %s30, 1
      %p304 = por %p302, %p303
      %p305 = scmp.ne.s32.totalorder %s294, %s295
      %p306 = scmp.eq.s32.totalorder %s30, 0
      %p307 = por %p305, %p306
      %p308 = scmp.ne.s32.totalorder %s294, %s295
      %p309 = scmp.eq.s32.totalorder %s31, 1
      %p310 = por %p308, %p309
      %p312 = scmp.ne.s32.totalorder %s295, %s311
      %p313 = scmp.eq.s32.totalorder %s31, 0
      %p314 = por %p312, %p313
      %s315 = ssub.s32 %s25, %s32
      %p316 = scmp.eq.s32.totalorder %s315, 0
      %s318 = sadd.s32 %s317, 1
      %s319 = scalar_select %p316, %s317, %s318
      %p322 = pneg %p316
      %p323 = scmp.eq.s32.totalorder %s25, 1
      %p324 = por %p322, %p323
      %p325 = scmp.ne.s32.totalorder %s317, %s320
      %p326 = scmp.eq.s32.totalorder %s25, 0
      %p327 = por %p325, %p326
      %p328 = scmp.ne.s32.totalorder %s317, %s320
      %p329 = scmp.eq.s32.totalorder %s30, 1
      %p330 = por %p328, %p329
      %p331 = scmp.ne.s32.totalorder %s320, %s321
      %p332 = scmp.eq.s32.totalorder %s30, 0
      %p333 = por %p331, %p332
      %p334 = scmp.ne.s32.totalorder %s320, %s321
      %p335 = scmp.eq.s32.totalorder %s31, 1
      %p336 = por %p334, %p335
      %p338 = scmp.ne.s32.totalorder %s321, %s337
      %p339 = scmp.eq.s32.totalorder %s31, 0
      %p340 = por %p338, %p339
      %s341 = ssub.s32 %s25, %s32
      %p342 = scmp.eq.s32.totalorder %s341, 0
      %s344 = sadd.s32 %s343, 1
      %s345 = scalar_select %p342, %s343, %s344
      %p348 = pneg %p342
      %p349 = scmp.eq.s32.totalorder %s25, 1
      %p350 = por %p348, %p349
      %p351 = scmp.ne.s32.totalorder %s343, %s346
      %p352 = scmp.eq.s32.totalorder %s25, 0
      %p353 = por %p351, %p352
      %p354 = scmp.ne.s32.totalorder %s343, %s346
      %p355 = scmp.eq.s32.totalorder %s30, 1
      %p356 = por %p354, %p355
      %p357 = scmp.ne.s32.totalorder %s346, %s347
      %p358 = scmp.eq.s32.totalorder %s30, 0
      %p359 = por %p357, %p358
      %p360 = scmp.ne.s32.totalorder %s346, %s347
      %p361 = scmp.eq.s32.totalorder %s31, 1
      %p362 = por %p360, %p361
      %p364 = scmp.ne.s32.totalorder %s347, %s363
      %p365 = scmp.eq.s32.totalorder %s31, 0
      %p366 = por %p364, %p365
      %s367 = ssub.s32 %s25, %s32
      %p368 = scmp.eq.s32.totalorder %s367, 0
      %s370 = sadd.s32 %s369, 1
      %s371 = scalar_select %p368, %s369, %s370
      %p374 = pneg %p368
      %p375 = scmp.eq.s32.totalorder %s25, 1
      %p376 = por %p374, %p375
      %p377 = scmp.ne.s32.totalorder %s369, %s372
      %p378 = scmp.eq.s32.totalorder %s25, 0
      %p379 = por %p377, %p378
      %p380 = scmp.ne.s32.totalorder %s369, %s372
      %p381 = scmp.eq.s32.totalorder %s30, 1
      %p382 = por %p380, %p381
      %p383 = scmp.ne.s32.totalorder %s372, %s373
      %p384 = scmp.eq.s32.totalorder %s30, 0
      %p385 = por %p383, %p384
      %p386 = scmp.ne.s32.totalorder %s372, %s373
      %p387 = scmp.eq.s32.totalorder %s31, 1
      %p388 = por %p386, %p387
      %p390 = scmp.ne.s32.totalorder %s373, %s389
      %p391 = scmp.eq.s32.totalorder %s31, 0
      %p392 = por %p390, %p391
      %s393 = ssub.s32 %s25, %s32
      %p394 = scmp.eq.s32.totalorder %s393, 0
      %s396 = sadd.s32 %s395, 1
      %s397 = scalar_select %p394, %s395, %s396
      %p400 = pneg %p394
      %p401 = scmp.eq.s32.totalorder %s25, 1
      %p402 = por %p400, %p401
      %p403 = scmp.ne.s32.totalorder %s395, %s398
      %p404 = scmp.eq.s32.totalorder %s25, 0
      %p405 = por %p403, %p404
      %p406 = scmp.ne.s32.totalorder %s395, %s398
      %p407 = scmp.eq.s32.totalorder %s30, 1
      %p408 = por %p406, %p407
      %p409 = scmp.ne.s32.totalorder %s398, %s399
      %p410 = scmp.eq.s32.totalorder %s30, 0
      %p411 = por %p409, %p410
      %p412 = scmp.ne.s32.totalorder %s398, %s399
      %p413 = scmp.eq.s32.totalorder %s31, 1
      %p414 = por %p412, %p413
      %p416 = scmp.ne.s32.totalorder %s399, %s415
      %p417 = scmp.eq.s32.totalorder %s31, 0
      %p418 = por %p416, %p417
      %s419 = ssub.s32 %s25, %s32
      %p420 = scmp.eq.s32.totalorder %s419, 0
      %s422 = sadd.s32 %s421, 1
      %s423 = scalar_select %p420, %s421, %s422
      %p426 = pneg %p420
      %p427 = scmp.eq.s32.totalorder %s25, 1
      %p428 = por %p426, %p427
      %p429 = scmp.ne.s32.totalorder %s421, %s424
      %p430 = scmp.eq.s32.totalorder %s25, 0
      %p431 = por %p429, %p430
      %p432 = scmp.ne.s32.totalorder %s421, %s424
      %p433 = scmp.eq.s32.totalorder %s30, 1
      %p434 = por %p432, %p433
      %p435 = scmp.ne.s32.totalorder %s424, %s425
      %p436 = scmp.eq.s32.totalorder %s30, 0
      %p437 = por %p435, %p436
      %p438 = scmp.ne.s32.totalorder %s424, %s425
      %p439 = scmp.eq.s32.totalorder %s31, 1
      %p440 = por %p438, %p439
      %p442 = scmp.ne.s32.totalorder %s425, %s441
      %p443 = scmp.eq.s32.totalorder %s31, 0
      %p444 = por %p442, %p443
      %s445 = ssub.s32 %s25, %s32
      %p446 = scmp.eq.s32.totalorder %s445, 0
      %s448 = sadd.s32 %s447, 1
      %s449 = scalar_select %p446, %s447, %s448
      %p452 = pneg %p446
      %p453 = scmp.eq.s32.totalorder %s25, 1
      %p454 = por %p452, %p453
      %p455 = scmp.ne.s32.totalorder %s447, %s450
      %p456 = scmp.eq.s32.totalorder %s25, 0
      %p457 = por %p455, %p456
      %p458 = scmp.ne.s32.totalorder %s447, %s450
      %p459 = scmp.eq.s32.totalorder %s30, 1
      %p460 = por %p458, %p459
      %p461 = scmp.ne.s32.totalorder %s450, %s451
      %p462 = scmp.eq.s32.totalorder %s30, 0
      %p463 = por %p461, %p462
      %p464 = scmp.ne.s32.totalorder %s450, %s451
      %p465 = scmp.eq.s32.totalorder %s31, 1
      %p466 = por %p464, %p465
      %p468 = scmp.ne.s32.totalorder %s451, %s467
      %p469 = scmp.eq.s32.totalorder %s31, 0
      %p470 = por %p468, %p469
      %s472 = sadd.s32 %s471, 1
      %p475 = scmp.eq.s32.totalorder %s25, 1
      %p476 = scmp.ne.s32.totalorder %s471, %s473
      %p477 = scmp.eq.s32.totalorder %s25, 0
      %p478 = por %p476, %p477
      %p479 = scmp.ne.s32.totalorder %s471, %s473
      %p480 = scmp.eq.s32.totalorder %s30, 1
      %p481 = por %p479, %p480
      %p482 = scmp.ne.s32.totalorder %s473, %s474
      %p483 = scmp.eq.s32.totalorder %s30, 0
      %p484 = por %p482, %p483
      %p485 = scmp.ne.s32.totalorder %s473, %s474
      %p486 = scmp.eq.s32.totalorder %s31, 1
      %p487 = por %p485, %p486
      %p489 = scmp.ne.s32.totalorder %s474, %s488
      %p490 = scmp.eq.s32.totalorder %s31, 0
      %p491 = por %p489, %p490
      %p492 = scmp.le.s32.totalorder 1, %s25
      %p493 = scmp.lt.s32.totalorder %s25, 3
      %p494 = pnand %p492, %p493
      %p495 = pneg %p494
      // Predicated region
      $region9: #{bioclinicalbert_ft_forward.1} parent=5 // pred_check
        _
      $region10: #{bioclinicalbert_ft_forward.1} parent=5 // pred_check_branch
        %497 = sbr.rel (%p494) target = $region12
      $region11: #{bioclinicalbert_ft_forward.1} parent=5 // pred_region
        %s498 = ssub.s32 %s25, 1
        // Predicated region
        $region13: #{bioclinicalbert_ft_forward.1} parent=11 // pred_check
          %p499 = pneg %p46
        $region14: #{bioclinicalbert_ft_forward.1} parent=11 // pred_check_branch
          %501 = sbr.rel (%p499) target = $region16
        $region15: #{bioclinicalbert_ft_forward.1} parent=11 // pred_region
          _
        $region16: #{bioclinicalbert_ft_forward.1} parent=11 // pred_fallthru
          _
        // Predicated region
        $region17: #{bioclinicalbert_ft_forward.1} parent=11 // pred_check
          %p502 = pneg %p67
        $region18: #{bioclinicalbert_ft_forward.1} parent=11 // pred_check_branch
          %504 = sbr.rel (%p502) target = $region20
        $region19: #{bioclinicalbert_ft_forward.1} parent=11 // pred_region
          _
        $region20: #{bioclinicalbert_ft_forward.1} parent=11 // pred_fallthru
          _
        // Predicated region
        $region21: #{bioclinicalbert_ft_forward.1} parent=11 // pred_check
          %p505 = pneg %p88
        $region22: #{bioclinicalbert_ft_forward.1} parent=11 // pred_check_branch
          %507 = sbr.rel (%p505) target = $region24
        $region23: #{bioclinicalbert_ft_forward.1} parent=11 // pred_region
          _
        $region24: #{bioclinicalbert_ft_forward.1} parent=11 // pred_fallthru
          _
        // Predicated region
        $region25: #{bioclinicalbert_ft_forward.1} parent=11 // pred_check
          %p508 = pneg %p109
        $region26: #{bioclinicalbert_ft_forward.1} parent=11 // pred_check_branch
          %510 = sbr.rel (%p508) target = $region28
        $region27: #{bioclinicalbert_ft_forward.1} parent=11 // pred_region
          _
        $region28: #{bioclinicalbert_ft_forward.1} parent=11 // pred_fallthru
          _
        // Predicated region
        $region29: #{bioclinicalbert_ft_forward.1} parent=11 // pred_check
          %p511 = pneg %p130
        $region30: #{bioclinicalbert_ft_forward.1} parent=11 // pred_check_branch
          %513 = sbr.rel (%p511) target = $region32
        $region31: #{bioclinicalbert_ft_forward.1} parent=11 // pred_region
          _
        $region32: #{bioclinicalbert_ft_forward.1} parent=11 // pred_fallthru
          _
        // Predicated region
        $region33: #{bioclinicalbert_ft_forward.1} parent=11 // pred_check
          %p514 = pneg %p151
        $region34: #{bioclinicalbert_ft_forward.1} parent=11 // pred_check_branch
          %516 = sbr.rel (%p514) target = $region36
        $region35: #{bioclinicalbert_ft_forward.1} parent=11 // pred_region
          _
        $region36: #{bioclinicalbert_ft_forward.1} parent=11 // pred_fallthru
          _
      $region12: #{bioclinicalbert_ft_forward.1} parent=5 // pred_fallthru
        _
      %p517 = scmp.lt.s32.totalorder %s25, 2
      // Predicated region
      $region37: #{bioclinicalbert_ft_forward.1} parent=5 // pred_check
        %p518 = pneg %p517
      $region38: #{bioclinicalbert_ft_forward.1} parent=5 // pred_check_branch
        %520 = sbr.rel (%p518) target = $region40
      $region39: #{bioclinicalbert_ft_forward.1} parent=5 // pred_region
        // Predicated region
        $region41: #{bioclinicalbert_ft_forward.1} parent=39 // pred_check
          %p521 = pneg %p171
        $region42: #{bioclinicalbert_ft_forward.1} parent=39 // pred_check_branch
          %523 = sbr.rel (%p521) target = $region44
        $region43: #{bioclinicalbert_ft_forward.1} parent=39 // pred_region
          %p524 = scmp.lt.s32.totalorder %s25, 1
          %s525 = scalar_select %p524, %s25, 1
          %s526 = smul.addr %s525, 4
          %s527 = smul.addr %s526, 4
          %s528 = scalar_lea.vmem %s6, %s527
        $region44: #{bioclinicalbert_ft_forward.1} parent=39 // pred_fallthru
          _
        // Predicated region
        $region45: #{bioclinicalbert_ft_forward.1} parent=39 // pred_check
          %p529 = pneg %p197
        $region46: #{bioclinicalbert_ft_forward.1} parent=39 // pred_check_branch
          %531 = sbr.rel (%p529) target = $region48
        $region47: #{bioclinicalbert_ft_forward.1} parent=39 // pred_region
          %p532 = scmp.lt.s32.totalorder %s25, 1
          %s533 = scalar_select %p532, %s25, 1
          %s534 = scalar_lea.vmem %s7, %s533
        $region48: #{bioclinicalbert_ft_forward.1} parent=39 // pred_fallthru
          _
        // Predicated region
        $region49: #{bioclinicalbert_ft_forward.1} parent=39 // pred_check
          %p535 = pneg %p223
        $region50: #{bioclinicalbert_ft_forward.1} parent=39 // pred_check_branch
          %537 = sbr.rel (%p535) target = $region52
        $region51: #{bioclinicalbert_ft_forward.1} parent=39 // pred_region
          %p538 = scmp.lt.s32.totalorder %s25, 1
          %s539 = scalar_select %p538, %s25, 1
          %s540 = smul.addr %s539, 4
          %s541 = smul.addr %s540, 4
          %s542 = scalar_lea.vmem %s8, %s541
        $region52: #{bioclinicalbert_ft_forward.1} parent=39 // pred_fallthru
          _
        // Predicated region
        $region53: #{bioclinicalbert_ft_forward.1} parent=39 // pred_check
          %p543 = pneg %p249
        $region54: #{bioclinicalbert_ft_forward.1} parent=39 // pred_check_branch
          %545 = sbr.rel (%p543) target = $region56
        $region55: #{bioclinicalbert_ft_forward.1} parent=39 // pred_region
          %p546 = scmp.lt.s32.totalorder %s25, 1
          %s547 = scalar_select %p546, %s25, 1
          %s548 = scalar_lea.vmem %s9, %s547
        $region56: #{bioclinicalbert_ft_forward.1} parent=39 // pred_fallthru
          _
        // Predicated region
        $region57: #{bioclinicalbert_ft_forward.1} parent=39 // pred_check
          %p549 = pneg %p275
        $region58: #{bioclinicalbert_ft_forward.1} parent=39 // pred_check_branch
          %551 = sbr.rel (%p549) target = $region60
        $region59: #{bioclinicalbert_ft_forward.1} parent=39 // pred_region
          %p552 = scmp.lt.s32.totalorder %s25, 1
          %s553 = scalar_select %p552, %s25, 1
          %s554 = scalar_lea.vmem %s10, %s553
        $region60: #{bioclinicalbert_ft_forward.1} parent=39 // pred_fallthru
          _
        // Predicated region
        $region61: #{bioclinicalbert_ft_forward.1} parent=39 // pred_check
          %p555 = pneg %p301
        $region62: #{bioclinicalbert_ft_forward.1} parent=39 // pred_check_branch
          %557 = sbr.rel (%p555) target = $region64
        $region63: #{bioclinicalbert_ft_forward.1} parent=39 // pred_region
          %p558 = scmp.lt.s32.totalorder %s25, 1
          %s559 = scalar_select %p558, %s25, 1
          %s560 = scalar_lea.vmem %s11, %s559
        $region64: #{bioclinicalbert_ft_forward.1} parent=39 // pred_fallthru
          _
        // Predicated region
        $region65: #{bioclinicalbert_ft_forward.1} parent=39 // pred_check
          %p561 = pneg %p327
        $region66: #{bioclinicalbert_ft_forward.1} parent=39 // pred_check_branch
          %563 = sbr.rel (%p561) target = $region68
        $region67: #{bioclinicalbert_ft_forward.1} parent=39 // pred_region
          %p564 = scmp.lt.s32.totalorder %s25, 1
          %s565 = scalar_select %p564, %s25, 1
          %s566 = smul.addr %s565, 4
          %s567 = smul.addr %s566, 4
          %s568 = scalar_lea.vmem %s12, %s567
        $region68: #{bioclinicalbert_ft_forward.1} parent=39 // pred_fallthru
          _
        // Predicated region
        $region69: #{bioclinicalbert_ft_forward.1} parent=39 // pred_check
          %p569 = pneg %p353
        $region70: #{bioclinicalbert_ft_forward.1} parent=39 // pred_check_branch
          %571 = sbr.rel (%p569) target = $region72
        $region71: #{bioclinicalbert_ft_forward.1} parent=39 // pred_region
          %p572 = scmp.lt.s32.totalorder %s25, 1
          %s573 = scalar_select %p572, %s25, 1
          %s574 = scalar_lea.vmem %s13, %s573
        $region72: #{bioclinicalbert_ft_forward.1} parent=39 // pred_fallthru
          _
        // Predicated region
        $region73: #{bioclinicalbert_ft_forward.1} parent=39 // pred_check
          %p575 = pneg %p379
        $region74: #{bioclinicalbert_ft_forward.1} parent=39 // pred_check_branch
          %577 = sbr.rel (%p575) target = $region76
        $region75: #{bioclinicalbert_ft_forward.1} parent=39 // pred_region
          %p578 = scmp.lt.s32.totalorder %s25, 1
          %s579 = scalar_select %p578, %s25, 1
          %s580 = smul.addr %s579, 8
          %s581 = smul.addr %s580, 4
          %s582 = scalar_lea.vmem %s14, %s581
        $region76: #{bioclinicalbert_ft_forward.1} parent=39 // pred_fallthru
          _
        // Predicated region
        $region77: #{bioclinicalbert_ft_forward.1} parent=39 // pred_check
          %p583 = pneg %p405
        $region78: #{bioclinicalbert_ft_forward.1} parent=39 // pred_check_branch
          %585 = sbr.rel (%p583) target = $region80
        $region79: #{bioclinicalbert_ft_forward.1} parent=39 // pred_region
          %p586 = scmp.lt.s32.totalorder %s25, 1
          %s587 = scalar_select %p586, %s25, 1
          %s588 = scalar_lea.vmem %s15, %s587
        $region80: #{bioclinicalbert_ft_forward.1} parent=39 // pred_fallthru
          _
        // Predicated region
        $region81: #{bioclinicalbert_ft_forward.1} parent=39 // pred_check
          %p589 = pneg %p431
        $region82: #{bioclinicalbert_ft_forward.1} parent=39 // pred_check_branch
          %591 = sbr.rel (%p589) target = $region84
        $region83: #{bioclinicalbert_ft_forward.1} parent=39 // pred_region
          %p592 = scmp.lt.s32.totalorder %s25, 1
          %s593 = scalar_select %p592, %s25, 1
          %s594 = scalar_lea.vmem %s16, %s593
        $region84: #{bioclinicalbert_ft_forward.1} parent=39 // pred_fallthru
          _
        // Predicated region
        $region85: #{bioclinicalbert_ft_forward.1} parent=39 // pred_check
          %p595 = pneg %p457
        $region86: #{bioclinicalbert_ft_forward.1} parent=39 // pred_check_branch
          %597 = sbr.rel (%p595) target = $region88
        $region87: #{bioclinicalbert_ft_forward.1} parent=39 // pred_region
          %p598 = scmp.lt.s32.totalorder %s25, 1
          %s599 = scalar_select %p598, %s25, 1
          %s600 = scalar_lea.vmem %s17, %s599
        $region88: #{bioclinicalbert_ft_forward.1} parent=39 // pred_fallthru
          _
      $region40: #{bioclinicalbert_ft_forward.1} parent=5 // pred_fallthru
        _
      %p601 = scmp.le.s32.totalorder 1, %s25
      %p602 = scmp.lt.s32.totalorder %s25, 3
      %p603 = pnand %p601, %p602
      %p604 = pneg %p603
      // Predicated region
      $region89: #{bioclinicalbert_ft_forward.1} parent=5 // pred_check
        _
      $region90: #{bioclinicalbert_ft_forward.1} parent=5 // pred_check_branch
        %606 = sbr.rel (%p603) target = $region92
      $region91: #{bioclinicalbert_ft_forward.1} parent=5 // pred_region
        %s607 = ssub.s32 %s25, 1
        %p608 = pneg %p46
        %p609 = pneg %p43
        %p610 = pneg %p67
        %p611 = pneg %p64
        %p612 = pneg %p88
        %p613 = pneg %p85
        %p614 = pneg %p109
        %p615 = pneg %p106
        %p616 = pneg %p130
        %p617 = pneg %p127
        %p618 = pneg %p151
        %p619 = pneg %p148
        %p620 = scmp.lt.s32.totalorder %s30, 1
        %s621 = scalar_select %p620, %s30, 1
        %s622 = smul.addr %s621, 4
        %s623 = smul.addr %s622, 4
        %s624 = scalar_lea.vmem %s6, %s623
        %p625 = pneg %p177
        %p626 = pneg %p174
        %p627 = scmp.lt.s32.totalorder %s30, 1
        %s628 = scalar_select %p627, %s30, 1
        %s629 = scalar_lea.vmem %s7, %s628
        %p630 = pneg %p203
        %p631 = pneg %p200
        %p632 = scmp.lt.s32.totalorder %s30, 1
        %s633 = scalar_select %p632, %s30, 1
        %s634 = smul.addr %s633, 4
        %s635 = smul.addr %s634, 4
        %s636 = scalar_lea.vmem %s8, %s635
        %p637 = pneg %p229
        %p638 = pneg %p226
        %p639 = scmp.lt.s32.totalorder %s30, 1
        %s640 = scalar_select %p639, %s30, 1
        %s641 = scalar_lea.vmem %s9, %s640
        %p642 = pneg %p255
        %p643 = pneg %p252
        %p644 = scmp.lt.s32.totalorder %s30, 1
        %s645 = scalar_select %p644, %s30, 1
        %s646 = scalar_lea.vmem %s10, %s645
        %p647 = pneg %p281
        %p648 = pneg %p278
        %p649 = scmp.lt.s32.totalorder %s30, 1
        %s650 = scalar_select %p649, %s30, 1
        %s651 = scalar_lea.vmem %s11, %s650
        %p652 = pneg %p307
        %p653 = pneg %p304
        %p654 = scmp.lt.s32.totalorder %s30, 1
        %s655 = scalar_select %p654, %s30, 1
        %s656 = smul.addr %s655, 4
        %s657 = smul.addr %s656, 4
        %s658 = scalar_lea.vmem %s12, %s657
        %p659 = pneg %p333
        %p660 = pneg %p330
        %p661 = scmp.lt.s32.totalorder %s30, 1
        %s662 = scalar_select %p661, %s30, 1
        %s663 = scalar_lea.vmem %s13, %s662
        %p664 = pneg %p359
        %p665 = pneg %p356
        %p666 = scmp.lt.s32.totalorder %s30, 1
        %s667 = scalar_select %p666, %s30, 1
        %s668 = smul.addr %s667, 8
        %s669 = smul.addr %s668, 4
        %s670 = scalar_lea.vmem %s14, %s669
        %p671 = pneg %p385
        %p672 = pneg %p382
        %p673 = scmp.lt.s32.totalorder %s30, 1
        %s674 = scalar_select %p673, %s30, 1
        %s675 = scalar_lea.vmem %s15, %s674
        %p676 = pneg %p411
        %p677 = pneg %p408
        %p678 = scmp.lt.s32.totalorder %s30, 1
        %s679 = scalar_select %p678, %s30, 1
        %s680 = scalar_lea.vmem %s16, %s679
        %p681 = pneg %p437
        %p682 = pneg %p434
        %p683 = scmp.lt.s32.totalorder %s30, 1
        %s684 = scalar_select %p683, %s30, 1
        %s685 = scalar_lea.vmem %s17, %s684
        %p686 = pneg %p463
        %p687 = pneg %p460
        %p688 = pneg %p484
        %p689 = pneg %p481
        %p690 = scmp.lt.s32.totalorder %s30, 1
        %s691 = scalar_select %p690, %s30, 1
        %s692 = smul.addr %s691, 4
        %s693 = smul.addr %s692, 4
        %s694 = scalar_lea.vmem %s6, %s693
        %p695 = scmp.lt.s32.totalorder %s30, 1
        %s696 = scalar_select %p695, %s30, 1
        %s697 = scalar_lea.vmem %s7, %s696
        %p698 = scmp.lt.s32.totalorder %s30, 1
        %s699 = scalar_select %p698, %s30, 1
        %s700 = smul.addr %s699, 4
        %s701 = smul.addr %s700, 4
        %s702 = scalar_lea.vmem %s8, %s701
        %p703 = scmp.lt.s32.totalorder %s30, 1
        %s704 = scalar_select %p703, %s30, 1
        %s705 = scalar_lea.vmem %s9, %s704
        %p706 = scmp.lt.s32.totalorder %s30, 1
        %s707 = scalar_select %p706, %s30, 1
        %s708 = scalar_lea.vmem %s10, %s707
        %p709 = scmp.lt.s32.totalorder %s30, 1
        %s710 = scalar_select %p709, %s30, 1
        %s711 = scalar_lea.vmem %s11, %s710
        %p712 = scmp.lt.s32.totalorder %s30, 1
        %s713 = scalar_select %p712, %s30, 1
        %s714 = smul.addr %s713, 4
        %s715 = smul.addr %s714, 4
        %s716 = scalar_lea.vmem %s12, %s715
        %p717 = scmp.lt.s32.totalorder %s30, 1
        %s718 = scalar_select %p717, %s30, 1
        %s719 = scalar_lea.vmem %s13, %s718
        %p720 = scmp.lt.s32.totalorder %s30, 1
        %s721 = scalar_select %p720, %s30, 1
        %s722 = smul.addr %s721, 8
        %s723 = smul.addr %s722, 4
        %s724 = scalar_lea.vmem %s14, %s723
        %p725 = scmp.lt.s32.totalorder %s30, 1
        %s726 = scalar_select %p725, %s30, 1
        %s727 = scalar_lea.vmem %s15, %s726
        %p728 = scmp.lt.s32.totalorder %s30, 1
        %s729 = scalar_select %p728, %s30, 1
        %s730 = scalar_lea.vmem %s16, %s729
        %p731 = scmp.lt.s32.totalorder %s30, 1
        %s732 = scalar_select %p731, %s30, 1
        %s733 = scalar_lea.vmem %s17, %s732
        %p735 = scmp.eq.s32.totalorder %s30, 0
        // Predicated region
        $region93: #{bioclinicalbert_ft_forward.1} parent=91 // pred_check
          %p736 = pneg %p735
        $region94: #{bioclinicalbert_ft_forward.1} parent=91 // pred_check_branch
          %738 = sbr.rel (%p736) target = $region96
        $region95: #{bioclinicalbert_ft_forward.1} parent=91 // pred_region
          %v739 = vld [vmem:[%s0] sm:$0xff]
          %v740 = vld [vmem:[%s0 + $0x8] sm:$0xff]
          %v741 = vlaneseq
          %v742 = vand.u32 %v741, 127
          %743 = vset.pattern.permute.xlu0 0
          %744 = vperm.xlu0 %743, %v739
          %v745 = vpop.permute.xlu0 %744
          %746 = vset.pattern.permute.xlu0 0
          %747 = vperm.xlu0 %746, %v740
          %v748 = vpop.permute.xlu0 %747
          %vm749 = vcmp.eq.s32.totalorder %v742, %v745
          %vm750 = vcmp.eq.s32.totalorder %v742, %v748
          %v751 = vsel %vm749, 1, 0
          %v752 = vsel %vm750, 1, 0
          %v753 = vcvt.s32.f32 %v751
          %v754 = vcvt.s32.f32 %v752
          %v755 = vpack.c.bf16 %v754, %v753
          %v756 = vld [vmem:[%s1] sm:$0xf]
          %v757 = vld [vmem:[%s1 + $0x4] sm:$0xf]
          %v758 = vld [vmem:[%s1 + $0x8] sm:$0xf]
          %v759 = vld [vmem:[%s1 + $0xc] sm:$0xf]
          %v760 = vld [vmem:[%s1 + $0x10] sm:$0xf]
          %v761 = vld [vmem:[%s1 + $0x14] sm:$0xf]
          %v762 = vld [vmem:[%s1 + $0x18] sm:$0xf]
          %v763 = vld [vmem:[%s1 + $0x1c] sm:$0xf]
          %v764 = vld [vmem:[%s2] sm:$0xff]
          %v765 = vld [vmem:[%s2 + $0x8] sm:$0xff]
          %v774 = vunpack.c.l.b16 %v756
          %v775 = vunpack.c.l.b16 %v757
          %v776 = vunpack.c.l.b16 %v758
          %v777 = vunpack.c.l.b16 %v759
          %v778 = vunpack.c.l.b16 %v760
          %v779 = vunpack.c.l.b16 %v761
          %v780 = vunpack.c.l.b16 %v762
          %v781 = vunpack.c.l.b16 %v763
          %v782 = vpack.c.b16 %v775, %v774
          %v783 = vpack.c.b16 %v777, %v776
          %v784 = vpack.c.b16 %v779, %v778
          %v785 = vpack.c.b16 %v781, %v780
          %vm790 = vcmask 523264
          %v792 = vsel %vm790, %v755, 0
          %794 = vmatpush.bf16.msra.mxu0 0
          %795 = vmatpush.bf16.msra.mxu0 0
          %796 = vmatpush.bf16.msra.mxu0 0
          %797 = vmatpush.bf16.msra.mxu0 0
          %798 = vmatpush.bf16.msra.mxu0 %v785
          %799 = vmatpush.bf16.msra.mxu0 %v784
          %800 = vmatpush.bf16.msra.mxu0 %v783
          %801 = vmatpush.bf16.msra.mxu0 %v782
          %802 = vmatmul.bf16.gmra.mxu0 %v792
          %v803 = vpop.f32.mrf.mxu0
          %v804 = vadd.f32 %v764, %v803
          %v805 = vpop.f32.mrf.mxu0
          %v806 = vadd.f32 %v765, %v805
          %807 = vdwg.mxu0
          %v808 = vld [vmem:[%s3] sm:$0x1]
          %v809 = vld [vmem:[%s4] sm:$0x1]
          %vm810 = vcmask 261120
          %v811 = vsel %vm810, %v804, 0.0
          %812 = vadd.xlane.f32.xlu0 %v811
          %v813 = vpop.xlane.xlu0 %812
          %v814 = vsel %vm810, %v806, 0.0
          %815 = vadd.xlane.f32.xlu0 %v814
          %v816 = vpop.xlane.xlu0 %815
          %v817 = vrcp.pop 32.0
          %v818 = vmul.f32 32.0, %v817
          %v819 = vsub.f32 1.0, %v818
          %v820 = vmul.f32 %v817, %v819
          %v821 = vadd.f32 %v817, %v820
          %vm822 = vweird.f32 %v817
          %v823 = vsel %vm822, %v817, %v821
          %v824 = vmul.f32 %v813, %v823
          %v825 = vmul.f32 %v816, %v823
          %v826 = vsub.f32 %v804, %v824
          %v827 = vsub.f32 %v806, %v825
          %v828 = vmul.f32 %v826, %v826
          %v829 = vmul.f32 %v827, %v827
          %v830 = vsel %vm810, %v828, 0.0
          %831 = vadd.xlane.f32.xlu0 %v830
          %v832 = vpop.xlane.xlu0 %831
          %v833 = vsel %vm810, %v829, 0.0
          %834 = vadd.xlane.f32.xlu0 %v833
          %v835 = vpop.xlane.xlu0 %834
          %v836 = vmul.f32 %v832, %v823
          %v837 = vmul.f32 %v835, %v823
          %v838 = vadd.f32 %v836, 1e-12
          %v839 = vadd.f32 %v837, 1e-12
          %v840 = vrsqrt.pop %v838
          %v841 = vmul.f32 %v840, %v838
          %v842 = vmul.f32 %v841, %v840
          %v843 = vmul.f32 0.5, %v842
          %v844 = vsub.f32 1.5, %v843
          %v845 = vmul.f32 %v840, %v844
          %vm846 = vweird.f32 %v838
          %vm847 = vweird.f32 %v840
          %vm848 = vmor %vm846, %vm847
          %v849 = vsel %vm848, %v840, %v845
          %v850 = vrsqrt.pop %v839
          %v851 = vmul.f32 %v850, %v839
          %v852 = vmul.f32 %v851, %v850
          %v853 = vmul.f32 0.5, %v852
          %v854 = vsub.f32 1.5, %v853
          %v855 = vmul.f32 %v850, %v854
          %vm856 = vweird.f32 %v839
          %vm857 = vweird.f32 %v850
          %vm858 = vmor %vm856, %vm857
          %v859 = vsel %vm858, %v850, %v855
          %v860 = vmul.f32 %v826, %v849
          %v861 = vmul.f32 %v827, %v859
          %v863 = vperm.slane %v808, 0
          %v865 = vmul.f32 %v860, %v863
          %v866 = vmul.f32 %v861, %v863
          %v868 = vperm.slane %v809, 0
          %v870 = vadd.f32 %v865, %v868
          %v871 = vadd.f32 %v866, %v868
          %872 = vst.msk [vmem:[#allocation2] sm:$0xff] %vm810, %v870
          %873 = vst.msk [vmem:[#allocation2 + $0x8] sm:$0xff] %vm810, %v871
        $region96: #{bioclinicalbert_ft_forward.1} parent=91 // pred_fallthru
          _
        %v874 = vld [vmem:[#allocation2] sm:$0xff]
        %v875 = vld [vmem:[#allocation2 + $0x8] sm:$0xff]
        %v876 = vld [vmem:[%s694] sm:$0xf]
        %v877 = vld [vmem:[%s694 + $0x4] sm:$0xf]
        %v878 = vld [vmem:[%s694 + $0x8] sm:$0xf]
        %v879 = vld [vmem:[%s694 + $0xc] sm:$0xf]
        %v880 = vpack.c.bf16 %v875, %v874
        %v881 = vld [vmem:[%s697] sm:$0x1]
        %v883 = vperm.slane %v881, 0
        %v889 = vunpack.c.l.b16 %v876
        %v890 = vunpack.c.l.b16 %v877
        %v891 = vunpack.c.l.b16 %v878
        %v892 = vunpack.c.l.b16 %v879
        %v893 = vpack.c.b16 %v890, %v889
        %v894 = vpack.c.b16 %v892, %v891
        %vm897 = vcmask 261120
        %v899 = vsel %vm897, %v880, 0
        %901 = vmatpush.bf16.msra.mxu0 0
        %902 = vmatpush.bf16.msra.mxu0 0
        %903 = vmatpush.bf16.msra.mxu0 0
        %904 = vmatpush.bf16.msra.mxu0 0
        %905 = vmatpush.bf16.msra.mxu0 0
        %906 = vmatpush.bf16.msra.mxu0 0
        %907 = vmatpush.bf16.msra.mxu0 %v894
        %908 = vmatpush.bf16.msra.mxu0 %v893
        %909 = vmatmul.bf16.gmra.mxu0 %v899
        %v910 = vpop.f32.mrf.mxu0
        %v911 = vadd.f32 %v883, %v910
        %v912 = vpop.f32.mrf.mxu0
        %v913 = vadd.f32 %v883, %v912
        %914 = vdwg.mxu0
        %v915 = vmul.f32 %v911, 0.25
        %v916 = vmul.f32 %v913, 0.25
        %v917 = vpack.c.bf16 %v915, %v915
        %v918 = vpack.c.bf16 %v916, %v916
        %v919 = vpack.c.bf16 %v911, %v911
        %v920 = vpack.c.bf16 %v913, %v913
        %v921 = vld [vmem:[%s5] sm:$0x3]
        %v923 = vrot.slane %v921, 1
        %v924 = vld [vmem:[%s702] sm:$0xf]
        %v925 = vld [vmem:[%s702 + $0x4] sm:$0xf]
        %v926 = vld [vmem:[%s702 + $0x8] sm:$0xf]
        %v927 = vld [vmem:[%s702 + $0xc] sm:$0xf]
        %v928 = vperm.slane %v921, 0
        %v929 = vperm.slane %v923, 0
        %v933 = vunpack.c.l.b16 %v919
        %v934 = vpack.c.b16 %v933, %v933
        %935 = vrot.lane.b32.xlu0 %v934, 96
        %v936 = vpop.permute.xlu0 %935
        %vm937 = vcmask 130048
        %v939 = vsel %vm937, %v917, 0
        %v942 = vsel %vm937, %v936, 0
        %944 = vmatpush.bf16.xpose.msra.mxu0 0
        %945 = vmatpush.bf16.xpose.msra.mxu0 0
        %946 = vmatpush.bf16.xpose.msra.mxu0 0
        %947 = vmatpush.bf16.xpose.msra.mxu0 0
        %948 = vmatpush.bf16.xpose.msra.mxu0 0
        %949 = vmatpush.bf16.xpose.msra.mxu0 0
        %950 = vmatpush.bf16.xpose.msra.mxu0 0
        %951 = vmatpush.bf16.xpose.msra.mxu0 %v942
        %952 = vmatmul.bf16.gmra.mxu0 %v939
        %v953 = vpop.f32.mrf.mxu0
        %v954 = vadd.f32 %v928, %v953
        %v955 = vpop.f32.mrf.mxu0
        %956 = vdwg.mxu0
        %v958 = vunpack.c.l.b16 %v920
        %v959 = vpack.c.b16 %v958, %v958
        %960 = vrot.lane.b32.xlu0 %v959, 96
        %v961 = vpop.permute.xlu0 %960
        %v963 = vsel %vm937, %v918, 0
        %v966 = vsel %vm937, %v961, 0
        %968 = vmatpush.bf16.xpose.msra.mxu0 0
        %969 = vmatpush.bf16.xpose.msra.mxu0 0
        %970 = vmatpush.bf16.xpose.msra.mxu0 0
        %971 = vmatpush.bf16.xpose.msra.mxu0 0
        %972 = vmatpush.bf16.xpose.msra.mxu0 0
        %973 = vmatpush.bf16.xpose.msra.mxu0 0
        %974 = vmatpush.bf16.xpose.msra.mxu0 0
        %975 = vmatpush.bf16.xpose.msra.mxu0 %v966
        %976 = vmatmul.bf16.gmra.mxu0 %v963
        %v977 = vpop.f32.mrf.mxu0
        %v978 = vadd.f32 %v929, %v977
        %v979 = vpop.f32.mrf.mxu0
        %980 = vdwg.mxu0
        %vm981 = vcmask 64512
        %v982 = vsel %vm981, %v954, -inf
        %983 = vmax.xlane.f32.xlu0 %v982
        %v984 = vpop.xlane.xlu0 %983
        %v985 = vsel %vm981, %v978, -inf
        %986 = vmax.xlane.f32.xlu0 %v985
        %v987 = vpop.xlane.xlu0 %986
        %v988 = vsub.f32 %v954, %v984
        %v989 = vsub.f32 %v978, %v987
        %v990 = vmul.f32 %v988, 1.442695
        %v991 = vpow.pop %v990
        %v992 = vmul.f32 %v989, 1.442695
        %v993 = vpow.pop %v992
        %v994 = vsel %vm981, %v991, 0.0
        %995 = vadd.xlane.f32.xlu0 %v994
        %v996 = vpop.xlane.xlu0 %995
        %v997 = vsel %vm981, %v993, 0.0
        %998 = vadd.xlane.f32.xlu0 %v997
        %v999 = vpop.xlane.xlu0 %998
        %v1000 = vrcp.pop %v996
        %v1001 = vrcp.pop %v999
        %v1002 = vmul.f32 %v991, %v1000
        %v1003 = vmul.f32 %v993, %v1001
        %v1004 = vpack.c.bf16 %v1002, %v1002
        %v1005 = vpack.c.bf16 %v1003, %v1003
        %1006 = vrot.lane.b32.xlu0 %v934, 64
        %v1007 = vpop.permute.xlu0 %1006
        %v1009 = vsel %vm981, %v1004, 0
        %vm1011 = vcmask 1043456
        %v1013 = vsel %vm1011, %v1007, 0
        %1015 = vmatpush.bf16.msra.mxu0 0
        %1016 = vmatpush.bf16.msra.mxu0 0
        %1017 = vmatpush.bf16.msra.mxu0 0
        %1018 = vmatpush.bf16.msra.mxu0 0
        %1019 = vmatpush.bf16.msra.mxu0 0
        %1020 = vmatpush.bf16.msra.mxu0 0
        %1021 = vmatpush.bf16.msra.mxu0 0
        %1022 = vmatpush.bf16.msra.mxu0 %v1013
        %1023 = vmatmul.bf16.gmra.mxu0 %v1009
        %v1024 = vpop.f32.mrf.mxu0
        %v1025 = vadd.f32 0.0, %v1024
        %v1026 = vpop.f32.mrf.mxu0
        %1027 = vdwg.mxu0
        %1028 = vrot.lane.b32.xlu0 %v959, 64
        %v1029 = vpop.permute.xlu0 %1028
        %v1031 = vsel %vm981, %v1005, 0
        %v1034 = vsel %vm1011, %v1029, 0
        %1036 = vmatpush.bf16.msra.mxu0 0
        %1037 = vmatpush.bf16.msra.mxu0 0
        %1038 = vmatpush.bf16.msra.mxu0 0
        %1039 = vmatpush.bf16.msra.mxu0 0
        %1040 = vmatpush.bf16.msra.mxu0 0
        %1041 = vmatpush.bf16.msra.mxu0 0
        %1042 = vmatpush.bf16.msra.mxu0 0
        %1043 = vmatpush.bf16.msra.mxu0 %v1034
        %1044 = vmatmul.bf16.gmra.mxu0 %v1031
        %v1045 = vpop.f32.mrf.mxu0
        %v1046 = vadd.f32 0.0, %v1045
        %v1047 = vpop.f32.mrf.mxu0
        %1048 = vdwg.mxu0
        %v1049 = vpack.c.bf16 %v1046, %v1025
        %v1051 = vunpack.c.l.b16 %v917
        %v1052 = vpack.c.b16 %v1051, %v1051
        %1053 = vrot.lane.b32.xlu0 %v1052, 112
        %v1054 = vpop.permute.xlu0 %1053
        %1055 = vrot.lane.b32.xlu0 %v934, 80
        %v1056 = vpop.permute.xlu0 %1055
        %v1058 = vsel %vm937, %v1054, 0
        %v1061 = vsel %vm937, %v1056, 0
        %1063 = vmatpush.bf16.xpose.msra.mxu0 0
        %1064 = vmatpush.bf16.xpose.msra.mxu0 0
        %1065 = vmatpush.bf16.xpose.msra.mxu0 0
        %1066 = vmatpush.bf16.xpose.msra.mxu0 0
        %1067 = vmatpush.bf16.xpose.msra.mxu0 0
        %1068 = vmatpush.bf16.xpose.msra.mxu0 0
        %1069 = vmatpush.bf16.xpose.msra.mxu0 0
        %1070 = vmatpush.bf16.xpose.msra.mxu0 %v1061
        %1071 = vmatmul.bf16.gmra.mxu0 %v1058
        %v1072 = vpop.f32.mrf.mxu0
        %v1073 = vadd.f32 %v928, %v1072
        %v1074 = vpop.f32.mrf.mxu0
        %1075 = vdwg.mxu0
        %v1077 = vunpack.c.l.b16 %v918
        %v1078 = vpack.c.b16 %v1077, %v1077
        %1079 = vrot.lane.b32.xlu0 %v1078, 112
        %v1080 = vpop.permute.xlu0 %1079
        %1081 = vrot.lane.b32.xlu0 %v959, 80
        %v1082 = vpop.permute.xlu0 %1081
        %v1084 = vsel %vm937, %v1080, 0
        %v1087 = vsel %vm937, %v1082, 0
        %1089 = vmatpush.bf16.xpose.msra.mxu0 0
        %1090 = vmatpush.bf16.xpose.msra.mxu0 0
        %1091 = vmatpush.bf16.xpose.msra.mxu0 0
        %1092 = vmatpush.bf16.xpose.msra.mxu0 0
        %1093 = vmatpush.bf16.xpose.msra.mxu0 0
        %1094 = vmatpush.bf16.xpose.msra.mxu0 0
        %1095 = vmatpush.bf16.xpose.msra.mxu0 0
        %1096 = vmatpush.bf16.xpose.msra.mxu0 %v1087
        %1097 = vmatmul.bf16.gmra.mxu0 %v1084
        %v1098 = vpop.f32.mrf.mxu0
        %v1099 = vadd.f32 %v929, %v1098
        %v1100 = vpop.f32.mrf.mxu0
        %1101 = vdwg.mxu0
        %v1102 = vsel %vm981, %v1073, -inf
        %1103 = vmax.xlane.f32.xlu0 %v1102
        %v1104 = vpop.xlane.xlu0 %1103
        %v1105 = vsel %vm981, %v1099, -inf
        %1106 = vmax.xlane.f32.xlu0 %v1105
        %v1107 = vpop.xlane.xlu0 %1106
        %v1108 = vsub.f32 %v1073, %v1104
        %v1109 = vsub.f32 %v1099, %v1107
        %v1110 = vmul.f32 %v1108, 1.442695
        %v1111 = vpow.pop %v1110
        %v1112 = vmul.f32 %v1109, 1.442695
        %v1113 = vpow.pop %v1112
        %v1114 = vsel %vm981, %v1111, 0.0
        %1115 = vadd.xlane.f32.xlu0 %v1114
        %v1116 = vpop.xlane.xlu0 %1115
        %v1117 = vsel %vm981, %v1113, 0.0
        %1118 = vadd.xlane.f32.xlu0 %v1117
        %v1119 = vpop.xlane.xlu0 %1118
        %v1120 = vrcp.pop %v1116
        %v1121 = vrcp.pop %v1119
        %v1122 = vmul.f32 %v1111, %v1120
        %v1123 = vmul.f32 %v1113, %v1121
        %v1124 = vpack.c.bf16 %v1122, %v1122
        %v1125 = vpack.c.bf16 %v1123, %v1123
        %1126 = vrot.lane.b32.xlu0 %v934, 48
        %v1127 = vpop.permute.xlu0 %1126
        %v1129 = vsel %vm981, %v1124, 0
        %v1132 = vsel %vm1011, %v1127, 0
        %1134 = vmatpush.bf16.msra.mxu0 0
        %1135 = vmatpush.bf16.msra.mxu0 0
        %1136 = vmatpush.bf16.msra.mxu0 0
        %1137 = vmatpush.bf16.msra.mxu0 0
        %1138 = vmatpush.bf16.msra.mxu0 0
        %1139 = vmatpush.bf16.msra.mxu0 0
        %1140 = vmatpush.bf16.msra.mxu0 0
        %1141 = vmatpush.bf16.msra.mxu0 %v1132
        %1142 = vmatmul.bf16.gmra.mxu0 %v1129
        %v1143 = vpop.f32.mrf.mxu0
        %v1144 = vadd.f32 0.0, %v1143
        %v1145 = vpop.f32.mrf.mxu0
        %1146 = vdwg.mxu0
        %1147 = vrot.lane.b32.xlu0 %v959, 48
        %v1148 = vpop.permute.xlu0 %1147
        %v1150 = vsel %vm981, %v1125, 0
        %v1153 = vsel %vm1011, %v1148, 0
        %1155 = vmatpush.bf16.msra.mxu0 0
        %1156 = vmatpush.bf16.msra.mxu0 0
        %1157 = vmatpush.bf16.msra.mxu0 0
        %1158 = vmatpush.bf16.msra.mxu0 0
        %1159 = vmatpush.bf16.msra.mxu0 0
        %1160 = vmatpush.bf16.msra.mxu0 0
        %1161 = vmatpush.bf16.msra.mxu0 0
        %1162 = vmatpush.bf16.msra.mxu0 %v1153
        %1163 = vmatmul.bf16.gmra.mxu0 %v1150
        %v1164 = vpop.f32.mrf.mxu0
        %v1165 = vadd.f32 0.0, %v1164
        %v1166 = vpop.f32.mrf.mxu0
        %1167 = vdwg.mxu0
        %v1168 = vpack.c.bf16 %v1165, %v1144
        %v1171 = vunpack.c.l.b16 %v926
        %v1172 = vunpack.c.l.b16 %v927
        %v1173 = vpack.c.b16 %v1172, %v1171
        %v1176 = vsel %vm937, %v1168, 0
        %1178 = vmatpush.bf16.msra.mxu0 0
        %1179 = vmatpush.bf16.msra.mxu0 0
        %1180 = vmatpush.bf16.msra.mxu0 0
        %1181 = vmatpush.bf16.msra.mxu0 0
        %1182 = vmatpush.bf16.msra.mxu0 0
        %1183 = vmatpush.bf16.msra.mxu0 0
        %1184 = vmatpush.bf16.msra.mxu0 0
        %1185 = vmatpush.bf16.msra.mxu0 %v1173
        %1186 = vmatmul.bf16.gmra.mxu0 %v1176
        %v1187 = vpop.f32.mrf.mxu0
        %v1188 = vadd.f32 0.0, %v1187
        %v1189 = vpop.f32.mrf.mxu0
        %v1190 = vadd.f32 0.0, %v1189
        %1191 = vdwg.mxu0
        %v1194 = vunpack.c.l.b16 %v924
        %v1195 = vunpack.c.l.b16 %v925
        %v1196 = vpack.c.b16 %v1195, %v1194
        %v1199 = vsel %vm937, %v1049, 0
        %1201 = vmatpush.bf16.msra.mxu0 0
        %1202 = vmatpush.bf16.msra.mxu0 0
        %1203 = vmatpush.bf16.msra.mxu0 0
        %1204 = vmatpush.bf16.msra.mxu0 0
        %1205 = vmatpush.bf16.msra.mxu0 0
        %1206 = vmatpush.bf16.msra.mxu0 0
        %1207 = vmatpush.bf16.msra.mxu0 0
        %1208 = vmatpush.bf16.msra.mxu0 %v1196
        %1209 = vmatmul.bf16.gmra.mxu0 %v1199
        %v1210 = vpop.f32.mrf.mxu0
        %v1211 = vadd.f32 %v1188, %v1210
        %v1212 = vpop.f32.mrf.mxu0
        %v1213 = vadd.f32 %v1190, %v1212
        %1214 = vdwg.mxu0
        %v1215 = vld [vmem:[%s705] sm:$0x1]
        %v1217 = vperm.slane %v1215, 0
        %v1219 = vadd.f32 %v1211, %v1217
        %v1220 = vadd.f32 %v1213, %v1217
        %v1221 = vadd.f32 %v874, %v1219
        %v1222 = vadd.f32 %v875, %v1220
        %v1223 = vld [vmem:[%s708] sm:$0x1]
        %v1224 = vld [vmem:[%s711] sm:$0x1]
        %v1225 = vsel %vm897, %v1221, 0.0
        %1226 = vadd.xlane.f32.xlu0 %v1225
        %v1227 = vpop.xlane.xlu0 %1226
        %v1228 = vsel %vm897, %v1222, 0.0
        %1229 = vadd.xlane.f32.xlu0 %v1228
        %v1230 = vpop.xlane.xlu0 %1229
        %v1231 = vrcp.pop 32.0
        %v1232 = vmul.f32 32.0, %v1231
        %v1233 = vsub.f32 1.0, %v1232
        %v1234 = vmul.f32 %v1231, %v1233
        %v1235 = vadd.f32 %v1231, %v1234
        %vm1236 = vweird.f32 %v1231
        %v1237 = vsel %vm1236, %v1231, %v1235
        %v1238 = vmul.f32 %v1227, %v1237
        %v1239 = vmul.f32 %v1230, %v1237
        %v1240 = vsub.f32 %v1221, %v1238
        %v1241 = vsub.f32 %v1222, %v1239
        %v1242 = vmul.f32 %v1240, %v1240
        %v1243 = vmul.f32 %v1241, %v1241
        %v1244 = vsel %vm897, %v1242, 0.0
        %1245 = vadd.xlane.f32.xlu0 %v1244
        %v1246 = vpop.xlane.xlu0 %1245
        %v1247 = vsel %vm897, %v1243, 0.0
        %1248 = vadd.xlane.f32.xlu0 %v1247
        %v1249 = vpop.xlane.xlu0 %1248
        %v1250 = vmul.f32 %v1246, %v1237
        %v1251 = vmul.f32 %v1249, %v1237
        %v1252 = vadd.f32 %v1250, 1e-12
        %v1253 = vadd.f32 %v1251, 1e-12
        %v1254 = vrsqrt.pop %v1252
        %v1255 = vmul.f32 %v1254, %v1252
        %v1256 = vmul.f32 %v1255, %v1254
        %v1257 = vmul.f32 0.5, %v1256
        %v1258 = vsub.f32 1.5, %v1257
        %v1259 = vmul.f32 %v1254, %v1258
        %vm1260 = vweird.f32 %v1252
        %vm1261 = vweird.f32 %v1254
        %vm1262 = vmor %vm1260, %vm1261
        %v1263 = vsel %vm1262, %v1254, %v1259
        %v1264 = vrsqrt.pop %v1253
        %v1265 = vmul.f32 %v1264, %v1253
        %v1266 = vmul.f32 %v1265, %v1264
        %v1267 = vmul.f32 0.5, %v1266
        %v1268 = vsub.f32 1.5, %v1267
        %v1269 = vmul.f32 %v1264, %v1268
        %vm1270 = vweird.f32 %v1253
        %vm1271 = vweird.f32 %v1264
        %vm1272 = vmor %vm1270, %vm1271
        %v1273 = vsel %vm1272, %v1264, %v1269
        %v1274 = vmul.f32 %v1240, %v1263
        %v1275 = vmul.f32 %v1241, %v1273
        %v1277 = vperm.slane %v1223, 0
        %v1279 = vmul.f32 %v1274, %v1277
        %v1280 = vmul.f32 %v1275, %v1277
        %v1282 = vperm.slane %v1224, 0
        %v1284 = vadd.f32 %v1279, %v1282
        %v1285 = vadd.f32 %v1280, %v1282
        %v1286 = vld [vmem:[%s716] sm:$0xf]
        %v1287 = vld [vmem:[%s716 + $0x4] sm:$0xf]
        %v1288 = vld [vmem:[%s716 + $0x8] sm:$0xf]
        %v1289 = vld [vmem:[%s716 + $0xc] sm:$0xf]
        %v1290 = vpack.c.bf16 %v1285, %v1284
        %v1291 = vld [vmem:[%s719] sm:$0x1]
        %v1293 = vperm.slane %v1291, 0
        %v1299 = vunpack.c.l.b16 %v1286
        %v1300 = vunpack.c.l.b16 %v1287
        %v1301 = vunpack.c.l.b16 %v1288
        %v1302 = vunpack.c.l.b16 %v1289
        %v1303 = vpack.c.b16 %v1300, %v1299
        %v1304 = vpack.c.b16 %v1302, %v1301
        %v1308 = vsel %vm897, %v1290, 0
        %1310 = vmatpush.bf16.msra.mxu0 0
        %1311 = vmatpush.bf16.msra.mxu0 0
        %1312 = vmatpush.bf16.msra.mxu0 0
        %1313 = vmatpush.bf16.msra.mxu0 0
        %1314 = vmatpush.bf16.msra.mxu0 0
        %1315 = vmatpush.bf16.msra.mxu0 0
        %1316 = vmatpush.bf16.msra.mxu0 %v1304
        %1317 = vmatpush.bf16.msra.mxu0 %v1303
        %1318 = vmatmul.bf16.gmra.mxu0 %v1308
        %v1319 = vpop.f32.mrf.mxu0
        %v1320 = vadd.f32 %v1293, %v1319
        %v1321 = vpop.f32.mrf.mxu0
        %v1322 = vadd.f32 %v1293, %v1321
        %1323 = vdwg.mxu0
        %v1324 = vmul.f32 %v1320, %v1320
        %v1325 = vmul.f32 %v1322, %v1322
        %v1326 = vmul.f32 %v1320, %v1324
        %v1327 = vmul.f32 %v1322, %v1325
        %v1328 = vmul.f32 %v1326, 0.044715
        %v1329 = vmul.f32 %v1327, 0.044715
        %v1330 = vadd.f32 %v1320, %v1328
        %v1331 = vadd.f32 %v1322, %v1329
        %v1332 = vmul.f32 %v1330, 0.7978846
        %v1333 = vmul.f32 %v1331, 0.7978846
        %v1334 = vtanh.pop %v1332
        %v1335 = vtanh.pop %v1333
        %v1336 = vadd.f32 %v1334, 1.0
        %v1337 = vadd.f32 %v1335, 1.0
        %v1338 = vmul.f32 %v1336, 0.5
        %v1339 = vmul.f32 %v1337, 0.5
        %v1340 = vmul.f32 %v1320, %v1338
        %v1341 = vmul.f32 %v1322, %v1339
        %v1342 = vld [vmem:[%s724] sm:$0xf]
        %v1343 = vld [vmem:[%s724 + $0x4] sm:$0xf]
        %v1344 = vld [vmem:[%s724 + $0x8] sm:$0xf]
        %v1345 = vld [vmem:[%s724 + $0xc] sm:$0xf]
        %v1346 = vld [vmem:[%s724 + $0x10] sm:$0xf]
        %v1347 = vld [vmem:[%s724 + $0x14] sm:$0xf]
        %v1348 = vld [vmem:[%s724 + $0x18] sm:$0xf]
        %v1349 = vld [vmem:[%s724 + $0x1c] sm:$0xf]
        %v1350 = vpack.c.bf16 %v1341, %v1340
        %v1351 = vld [vmem:[%s727] sm:$0x1]
        %v1353 = vperm.slane %v1351, 0
        %v1363 = vunpack.c.l.b16 %v1342
        %v1364 = vunpack.c.l.b16 %v1343
        %v1365 = vunpack.c.l.b16 %v1344
        %v1366 = vunpack.c.l.b16 %v1345
        %v1367 = vunpack.c.l.b16 %v1346
        %v1368 = vunpack.c.l.b16 %v1347
        %v1369 = vunpack.c.l.b16 %v1348
        %v1370 = vunpack.c.l.b16 %v1349
        %v1371 = vpack.c.b16 %v1364, %v1363
        %v1372 = vpack.c.b16 %v1366, %v1365
        %v1373 = vpack.c.b16 %v1368, %v1367
        %v1374 = vpack.c.b16 %v1370, %v1369
        %vm1379 = vcmask 523264
        %v1381 = vsel %vm1379, %v1350, 0
        %1383 = vmatpush.bf16.msra.mxu0 0
        %1384 = vmatpush.bf16.msra.mxu0 0
        %1385 = vmatpush.bf16.msra.mxu0 0
        %1386 = vmatpush.bf16.msra.mxu0 0
        %1387 = vmatpush.bf16.msra.mxu0 %v1374
        %1388 = vmatpush.bf16.msra.mxu0 %v1373
        %1389 = vmatpush.bf16.msra.mxu0 %v1372
        %1390 = vmatpush.bf16.msra.mxu0 %v1371
        %1391 = vmatmul.bf16.gmra.mxu0 %v1381
        %v1392 = vpop.f32.mrf.mxu0
        %v1393 = vadd.f32 %v1353, %v1392
        %v1394 = vpop.f32.mrf.mxu0
        %v1395 = vadd.f32 %v1353, %v1394
        %1396 = vdwg.mxu0
        %v1397 = vadd.f32 %v1284, %v1393
        %v1398 = vadd.f32 %v1285, %v1395
        %v1399 = vld [vmem:[%s730] sm:$0x1]
        %v1400 = vld [vmem:[%s733] sm:$0x1]
        %v1401 = vsel %vm897, %v1397, 0.0
        %1402 = vadd.xlane.f32.xlu0 %v1401
        %v1403 = vpop.xlane.xlu0 %1402
        %v1404 = vsel %vm897, %v1398, 0.0
        %1405 = vadd.xlane.f32.xlu0 %v1404
        %v1406 = vpop.xlane.xlu0 %1405
        %v1407 = vmul.f32 %v1403, %v1237
        %v1408 = vmul.f32 %v1406, %v1237
        %v1409 = vsub.f32 %v1397, %v1407
        %v1410 = vsub.f32 %v1398, %v1408
        %v1411 = vmul.f32 %v1409, %v1409
        %v1412 = vmul.f32 %v1410, %v1410
        %v1413 = vsel %vm897, %v1411, 0.0
        %1414 = vadd.xlane.f32.xlu0 %v1413
        %v1415 = vpop.xlane.xlu0 %1414
        %v1416 = vsel %vm897, %v1412, 0.0
        %1417 = vadd.xlane.f32.xlu0 %v1416
        %v1418 = vpop.xlane.xlu0 %1417
        %v1419 = vmul.f32 %v1415, %v1237
        %v1420 = vmul.f32 %v1418, %v1237
        %v1421 = vadd.f32 %v1419, 1e-12
        %v1422 = vadd.f32 %v1420, 1e-12
        %v1423 = vrsqrt.pop %v1421
        %v1424 = vmul.f32 %v1423, %v1421
        %v1425 = vmul.f32 %v1424, %v1423
        %v1426 = vmul.f32 0.5, %v1425
        %v1427 = vsub.f32 1.5, %v1426
        %v1428 = vmul.f32 %v1423, %v1427
        %vm1429 = vweird.f32 %v1421
        %vm1430 = vweird.f32 %v1423
        %vm1431 = vmor %vm1429, %vm1430
        %v1432 = vsel %vm1431, %v1423, %v1428
        %v1433 = vrsqrt.pop %v1422
        %v1434 = vmul.f32 %v1433, %v1422
        %v1435 = vmul.f32 %v1434, %v1433
        %v1436 = vmul.f32 0.5, %v1435
        %v1437 = vsub.f32 1.5, %v1436
        %v1438 = vmul.f32 %v1433, %v1437
        %vm1439 = vweird.f32 %v1422
        %vm1440 = vweird.f32 %v1433
        %vm1441 = vmor %vm1439, %vm1440
        %v1442 = vsel %vm1441, %v1433, %v1438
        %v1443 = vmul.f32 %v1409, %v1432
        %v1444 = vmul.f32 %v1410, %v1442
        %v1446 = vperm.slane %v1399, 0
        %v1448 = vmul.f32 %v1443, %v1446
        %v1449 = vmul.f32 %v1444, %v1446
        %v1451 = vperm.slane %v1400, 0
        %v1453 = vadd.f32 %v1448, %v1451
        %v1454 = vadd.f32 %v1449, %v1451
        %1455 = vst.msk [vmem:[#allocation2] sm:$0xff] %vm897, %v1453
        %1456 = vst.msk [vmem:[#allocation2 + $0x8] sm:$0xff] %vm897, %v1454
        %p1457 = scmp.eq.s32.totalorder %s30, 1
        // Predicated region
        $region97: #{bioclinicalbert_ft_forward.1} parent=91 // pred_check
          %p1458 = pneg %p1457
        $region98: #{bioclinicalbert_ft_forward.1} parent=91 // pred_check_branch
          %1460 = sbr.rel (%p1458) target = $region100
        $region99: #{bioclinicalbert_ft_forward.1} parent=91 // pred_region
          %v1463 = vrot.slane %v1454, 7
          %vm1464 = vcmask 1041409
          %v1465 = vsel %vm1464, %v1463, %v1453
          %vm1467 = vcmask 254976
          %1468 = vst.msk [vmem:[#allocation3] sm:$0x3] %vm1467, %v1465
        $region100: #{bioclinicalbert_ft_forward.1} parent=91 // pred_fallthru
          _
        // Predicated region
        $region101: #{bioclinicalbert_ft_forward.1} parent=91 // pred_check
          %p1469 = pneg %p481
        $region102: #{bioclinicalbert_ft_forward.1} parent=91 // pred_check_branch
          %1471 = sbr.rel (%p1469) target = $region104
        $region103: #{bioclinicalbert_ft_forward.1} parent=91 // pred_region
          %1473 = vsyncadd [#allocation4], 0
          %s1475 = sshll.u32 [#allocation3], 4
          %s1476 = int_to_ptr.vmem [resolvable:$true] %s1475
          %s1477 = sshll.u32 %s18, 4
          %s1478 = int_to_ptr.hbm [resolvable:$true] %s1477
          %1480 = dma.vmem_to_hbm [thread:$0]  %s1476, 32, %s1478, [#allocation4]
        $region104: #{bioclinicalbert_ft_forward.1} parent=91 // pred_fallthru
          _
        // Predicated region
        $region105: #{bioclinicalbert_ft_forward.1} parent=91 // pred_check
          %p1481 = pneg %p481
        $region106: #{bioclinicalbert_ft_forward.1} parent=91 // pred_check_branch
          %1483 = sbr.rel (%p1481) target = $region108
        $region107: #{bioclinicalbert_ft_forward.1} parent=91 // pred_region
          %1485 = dma.done [#allocation4], 32
        $region108: #{bioclinicalbert_ft_forward.1} parent=91 // pred_fallthru
          _
      $region92: #{bioclinicalbert_ft_forward.1} parent=5 // pred_fallthru
        _
      %p1486 = scmp.le.s32.totalorder 2, %s25
      // Predicated region
      $region109: #{bioclinicalbert_ft_forward.1} parent=5 // pred_check
        %p1487 = pneg %p1486
      $region110: #{bioclinicalbert_ft_forward.1} parent=5 // pred_check_branch
        %1489 = sbr.rel (%p1487) target = $region112
      $region111: #{bioclinicalbert_ft_forward.1} parent=5 // pred_region
        %s1490 = ssub.s32 %s25, 2
      $region112: #{bioclinicalbert_ft_forward.1} parent=5 // pred_fallthru
        _
    $region6: #{bioclinicalbert_ft_forward.1} parent=1 // loop_footer
      %s29 = sadd.s32 1, %s25
    $region7: #{bioclinicalbert_ft_forward.1} parent=1 // loop_footer_branch
      %24 = sbr.rel target = $region3
    $region8: #{bioclinicalbert_ft_forward.1} parent=1 // loop_exit
      _
    %1491 = vsyncpa [#allocation4], 1
    %s1492 = scalar_lea.sflag [#allocation4], 1
    %1493 = vsyncpa %s1492, 1

</llo_original>
